<compile_context>
chip_gen: v7x
topology: tpu7x:2x2x1
jax: 0.10.0
libtpu: 0.0.40
codegen_flags: <defaults>
</compile_context>

<pallas_src>
import functools

import jax
import jax.numpy as jnp
from jax import lax
from jax.experimental import pallas as pl
from jax.experimental.pallas import tpu as pltpu


# -----------------------------------------------------------------------------
# Kernel
# -----------------------------------------------------------------------------
def _make_wide_basic_kernel(Nb, H, W, Cin, Cmid, Cout, has_downsample):
    """Fused per-block kernel; the grid iterates over batch blocks of Nb images.

    All activations are (rows, W*C) slabs: row = image*H + h, lane = w*C + c.
    """
    WCin, WCmid, WCout = W * Cin, W * Cmid, W * Cout
    M = Nb * H
    f32 = jnp.float32

    def zero_row_halo(pad_ref, wc):
        # Only the single halo row above/below each image needs zeroing; the
        # interior is fully rewritten every grid step.  (Kept per-step because
        # the batch axis is "parallel": with megacore the 2nd core never sees
        # program_id == 0, so a first-step gate would leave its halo garbage.)
        z = jnp.zeros((Nb, 1, wc), pad_ref.dtype)
        pad_ref[:, pl.ds(0, 1), :] = z
        pad_ref[:, pl.ds(H + 1, 1), :] = z

    def conv_band(pad_ref, w_ref, kdim, ndim):
        # 3 matmuls, one per ky.  The 3 kx taps live inside the banded weight
        # matrix, so the horizontal shift needs no roll / slice / mask; the ky
        # shift is a plain row-range read of the zero-haloed scratch.
        acc = jnp.zeros((M, ndim), f32)
        for ky in range(3):
            win = pad_ref[:, pl.ds(ky, H), :].reshape(M, kdim)
            acc = acc + jnp.dot(win, w_ref[ky], preferred_element_type=f32)
        return acc

    def kernel(*refs):
        if has_downsample:
            (x_ref, s1_ref, b1_ref, w1_ref, s2_ref, b2_ref, w2_ref, wd_ref,
             o_ref, y1_pad, y2_pad) = refs
        else:
            (x_ref, s1_ref, b1_ref, w1_ref, s2_ref, b2_ref, w2_ref,
             o_ref, y1_pad, y2_pad) = refs
            wd_ref = None

        zero_row_halo(y1_pad, WCin)
        zero_row_halo(y2_pad, WCmid)

        # ---- stage 1: a1 = relu(bn1(x)) (f32 math), stored as dot-dtype slab
        x = x_ref[...].astype(f32).reshape(M, WCin)
        a1 = jnp.maximum(x * s1_ref[...] + b1_ref[...], 0.0)
        y1_pad[:, pl.ds(1, H), :] = a1.reshape(Nb, H, WCin).astype(y1_pad.dtype)

        # ---- stage 2: a2 = relu(bn2(conv1(a1))) -----------------------------
        c1 = conv_band(y1_pad, w1_ref, WCin, WCmid)
        a2 = jnp.maximum(c1 * s2_ref[...] + b2_ref[...], 0.0)
        y2_pad[:, pl.ds(1, H), :] = a2.reshape(Nb, H, WCmid).astype(y2_pad.dtype)

        # ---- stage 3: out = conv2(a2) + shortcut (single lane-dense store) --
        c2 = conv_band(y2_pad, w2_ref, WCmid, WCout)
        if has_downsample:
            # downsample applied to relu(bn1(x)) -- matches the torch forward.
            a1s = y1_pad[:, pl.ds(1, H), :].reshape(M, WCin)
            sc = jnp.dot(a1s, wd_ref[...], preferred_element_type=f32)
        else:
            sc = x_ref[...].astype(f32).reshape(M, WCout)   # identity (Cin==Cout)
        o_ref[...] = (c2 + sc).reshape(Nb, H, WCout).astype(o_ref.dtype)

    return kernel


# -----------------------------------------------------------------------------
# Wrapper helpers
# -----------------------------------------------------------------------------
def _fold_bn(gamma, beta, mean, var, eps=1e-5):
    scale = gamma / jnp.sqrt(var + eps)
    bias = beta - mean * scale
    return scale.astype(jnp.float32), bias.astype(jnp.float32)


def _expand_conv3x3(w3, W):
    """(3,3,Cin,Cout) HWIO -> (3, W*Cin, W*Cout) banded per-ky matrices.

    M_ky[w*Cin+ci, w'*Cout+co] = w3[ky, w-w'+1, ci, co]  when |w-w'| <= 1.
    """
    _, _, Cin, Cout = w3.shape
    wi = jnp.arange(W)[:, None]            # source column  w
    wo = jnp.arange(W)[None, :]            # output column  w'
    kx = wi - wo + 1                       # kx tap index
    valid = ((kx >= 0) & (kx <= 2)).astype(w3.dtype)
    band = w3[:, jnp.clip(kx, 0, 2)]       # (3, W, W, Cin, Cout)
    band = band * valid[None, :, :, None, None]
    band = jnp.transpose(band, (0, 1, 3, 2, 4))        # (3, W, Cin, W, Cout)
    return band.reshape(3, W * Cin, W * Cout)


def _expand_conv1x1(w1x1, W):
    """(Cin, Cout) -> (W*Cin, W*Cout) block-diagonal matrix."""
    Cin, Cout = w1x1.shape
    eye = jnp.eye(W, dtype=w1x1.dtype)
    exp = eye[:, None, :, None] * w1x1[None, :, None, :]
    return exp.reshape(W * Cin, W * Cout)


def _pick_batch_block(n, per_image_bytes, fixed_bytes, budget, cap=8):
    """Largest Nb that fits the VMEM budget and keeps grid length >= 2
    (DMA pipelining + both v7x TensorCores busy)."""
    divisors = [d for d in range(1, min(n, cap) + 1) if n % d == 0]
    fits = lambda nb: fixed_bytes + nb * per_image_bytes <= budget
    good = [d for d in divisors if fits(d) and n // d >= 2]
    if good:
        return max(good)
    okay = [d for d in divisors if fits(d)]
    return max(okay) if okay else 1


# -----------------------------------------------------------------------------
# Forward
# -----------------------------------------------------------------------------
@functools.partial(jax.jit, static_argnames=("stride", "dot_dtype"))
def wide_basic_forward(x_nchw, params, *, stride=1, dot_dtype=jnp.float32):
    assert stride == 1, "only stride=1 implemented in the Pallas path"
    N, Cin, H, W = x_nchw.shape
    Cmid = params["w1"].shape[3]
    Cout = params["w2"].shape[3]
    has_ds = params["wd"] is not None
    if not has_ds:
        assert Cin == Cout, "identity shortcut requires in_planes == planes"

    f32 = jnp.float32
    dsize = jnp.dtype(dot_dtype).itemsize
    WCin, WCmid, WCout = W * Cin, W * Cmid, W * Cout

    # --- VMEM footprint estimate (per image): 2x double-buffered x/out blocks,
    #     both padded scratches, plus vreg/spill-resident intermediates. -------
    per_img = (2 * H * WCin * 4 + 2 * H * WCout * 4
               + (H + 2) * WCin * dsize + (H + 2) * WCmid * dsize
               + H * (WCin + 2 * WCmid + WCout) * 4)
    fixed = (2 * (3 * WCin * WCmid + 3 * WCmid * WCout
                  + (WCin * WCout if has_ds else 0)) * dsize
             + 4 * (WCin + WCmid) * 4)
    budget = 40 * 1024 * 1024                      # conservative for v7x's 64 MiB
    Nb = _pick_batch_block(N, per_img, fixed, budget)
    vmem_limit = int(min(56 << 20, max(32 << 20, fixed + Nb * per_img + (4 << 20))))

    # --- layout: NCHW -> NHWC -> lane-dense (N, H, W*C) slab ------------------
    x = jnp.transpose(x_nchw, (0, 2, 3, 1)).astype(f32).reshape(N, H, WCin)

    s1, b1 = _fold_bn(*params["bn1"])
    s2, b2 = _fold_bn(*params["bn2"])
    s1 = jnp.tile(s1, W).reshape(1, WCin)          # lane = w*C + c -> tile over W
    b1 = jnp.tile(b1, W).reshape(1, WCin)
    s2 = jnp.tile(s2, W).reshape(1, WCmid)
    b2 = jnp.tile(b2, W).reshape(1, WCmid)

    w1 = _expand_conv3x3(params["w1"].astype(f32), W).astype(dot_dtype)
    w2 = _expand_conv3x3(params["w2"].astype(f32), W).astype(dot_dtype)

    in_specs = [
        pl.BlockSpec((Nb, H, WCin), lambda n: (n, 0, 0)),
        pl.BlockSpec((1, WCin), lambda n: (0, 0)),
        pl.BlockSpec((1, WCin), lambda n: (0, 0)),
        pl.BlockSpec((3, WCin, WCmid), lambda n: (0, 0, 0)),
        pl.BlockSpec((1, WCmid), lambda n: (0, 0)),
        pl.BlockSpec((1, WCmid), lambda n: (0, 0)),
        pl.BlockSpec((3, WCmid, WCout), lambda n: (0, 0, 0)),
    ]
    args = [x, s1, b1, w1, s2, b2, w2]
    if has_ds:
        wd = _expand_conv1x1(params["wd"].reshape(Cin, Cout).astype(f32),
                             W).astype(dot_dtype)
        in_specs.append(pl.BlockSpec((WCin, WCout), lambda n: (0, 0)))
        args.append(wd)

    kernel = _make_wide_basic_kernel(Nb, H, W, Cin, Cmid, Cout, has_ds)

    out_slab = pl.pallas_call(
        kernel,
        out_shape=jax.ShapeDtypeStruct((N, H, WCout), f32),
        grid_spec=pltpu.PrefetchScalarGridSpec(
            num_scalar_prefetch=0,
            grid=(N // Nb,),
            in_specs=in_specs,
            out_specs=pl.BlockSpec((Nb, H, WCout), lambda n: (n, 0, 0)),
            scratch_shapes=[
                pltpu.VMEM((Nb, H + 2, WCin), dot_dtype),
                pltpu.VMEM((Nb, H + 2, WCmid), dot_dtype),
            ],
        ),
        compiler_params=pltpu.CompilerParams(
            dimension_semantics=("parallel",),      # independent images -> 2 TCs on v7x
            vmem_limit_bytes=vmem_limit),
    )(*args)

    out = out_slab.reshape(N, H, W, Cout)
    return jnp.transpose(out, (0, 3, 1, 2))                        # back to NCHW


# -----------------------------------------------------------------------------
# Pure-JAX reference (for a correctness check)
# -----------------------------------------------------------------------------
def ref_forward(x_nchw, params):
    dn = ("NHWC", "HWIO", "NHWC")
    x = jnp.transpose(x_nchw, (0, 2, 3, 1)).astype(jnp.float32)
    s1, b1 = _fold_bn(*params["bn1"])
    s2, b2 = _fold_bn(*params["bn2"])
    y1 = jnp.maximum(x * s1 + b1, 0.0)
    if params["wd"] is not None:
        shortcut = lax.conv_general_dilated(
            y1, params["wd"], (1, 1), "VALID", dimension_numbers=dn,
            precision=lax.Precision.HIGHEST)
    else:
        shortcut = x
    c1 = lax.conv_general_dilated(
        y1, params["w1"], (1, 1), ((1, 1), (1, 1)), dimension_numbers=dn,
        precision=lax.Precision.HIGHEST)
    y2 = jnp.maximum(c1 * s2 + b2, 0.0)
    c2 = lax.conv_general_dilated(
        y2, params["w2"], (1, 1), ((1, 1), (1, 1)), dimension_numbers=dn,
        precision=lax.Precision.HIGHEST)
    out = c2 + shortcut
    return jnp.transpose(out, (0, 3, 1, 2))


def _make_params(key, cin, cmid, cout, with_downsample):
    ks = jax.random.split(key, 12)
    params = {
        "bn1": (  # gamma, beta, running_mean, running_var
            1.0 + 0.1 * jax.random.normal(ks[1], (cin,), jnp.float32),
            0.1 * jax.random.normal(ks[2], (cin,), jnp.float32),
            0.1 * jax.random.normal(ks[3], (cin,), jnp.float32),
            0.5 + jax.random.uniform(ks[4], (cin,), jnp.float32),
        ),
        "w1": jax.random.normal(ks[5], (3, 3, cin, cmid), jnp.float32)
              / jnp.sqrt(9.0 * cin),
        "bn2": (
            1.0 + 0.1 * jax.random.normal(ks[6], (cmid,), jnp.float32),
            0.1 * jax.random.normal(ks[7], (cmid,), jnp.float32),
            0.1 * jax.random.normal(ks[8], (cmid,), jnp.float32),
            0.5 + jax.random.uniform(ks[9], (cmid,), jnp.float32),
        ),
        "w2": jax.random.normal(ks[10], (3, 3, cmid, cout), jnp.float32)
              / jnp.sqrt(9.0 * cmid),
        "wd": (jax.random.normal(ks[11], (1, 1, cin, cout), jnp.float32)
               / jnp.sqrt(float(cin))) if with_downsample else None,
    }
    return params


# -----------------------------------------------------------------------------
# Main
# -----------------------------------------------------------------------------
if __name__ == "__main__":
    # config A: wide_basic(in_planes=4, planes=8, stride=1, widen_factor=2)
    #   -> conv1: 4 -> 16, conv2: 16 -> 8, downsample (1x1): 4 -> 8
    N, Cin, H, W = 2, 4, 16, 16
    planes, widen_factor, partition_num_sites, stride = 8, 2, 1, 1
    Cmid = int(planes * widen_factor / partition_num_sites)
    Cout = planes

    key = jax.random.PRNGKey(0)
    x = jax.random.normal(jax.random.split(key, 12)[0], (N, Cin, H, W),
                          jnp.float32)
    params = _make_params(key, Cin, Cmid, Cout, with_downsample=True)

    ref = ref_forward(x, params)

    # f32 MXU inputs (tight tolerance)
    out = jax.block_until_ready(wide_basic_forward(x, params, stride=stride))
    assert out.shape == (N, Cout, H, W), out.shape
    err = float(jnp.max(jnp.abs(out - ref)))
    assert err < 2e-3, f"f32 path mismatch vs reference: max|diff|={err}"

    # bf16 MXU inputs, f32 accumulation (v6e/v7x fast path; looser tolerance)
    out_bf = jax.block_until_ready(
        wide_basic_forward(x, params, stride=stride, dot_dtype=jnp.bfloat16))
    err_bf = float(jnp.max(jnp.abs(out_bf - ref)))
    assert err_bf < 2e-1, f"bf16 path mismatch vs reference: max|diff|={err_bf}"

    # config B: identity shortcut (in_planes == planes, no downsample conv)
    key_b = jax.random.PRNGKey(1)
    x_b = jax.random.normal(jax.random.split(key_b, 12)[0],
                            (N, planes, H, W), jnp.float32)
    params_b = _make_params(key_b, planes, Cmid, planes, with_downsample=False)
    out_b = jax.block_until_ready(wide_basic_forward(x_b, params_b, stride=1))
    ref_b = ref_forward(x_b, params_b)
    err_b = float(jnp.max(jnp.abs(out_b - ref_b)))
    assert err_b < 2e-3, f"identity path mismatch vs reference: max|diff|={err_b}"

    print("KERNEL_OK")
</pallas_src>

<mosaic_0001>
module attributes {stable_mosaic.version = 11 : i64} {
  func.func @kernel(%arg0: i32, %arg1: memref<1x16x64xf32, #tpu.memory_space<vmem>>, %arg2: memref<1x64xf32, #tpu.memory_space<vmem>>, %arg3: memref<1x64xf32, #tpu.memory_space<vmem>>, %arg4: memref<3x64x256xf32, #tpu.memory_space<vmem>>, %arg5: memref<1x256xf32, #tpu.memory_space<vmem>>, %arg6: memref<1x256xf32, #tpu.memory_space<vmem>>, %arg7: memref<3x256x128xf32, #tpu.memory_space<vmem>>, %arg8: memref<64x128xf32, #tpu.memory_space<vmem>>, %arg9: memref<1x16x128xf32, #tpu.memory_space<vmem>>, %arg10: memref<1x18x64xf32, #tpu.memory_space<vmem>>, %arg11: memref<1x18x256xf32, #tpu.memory_space<vmem>>) attributes {dimension_semantics = [#tpu.dimension_semantics<parallel>], iteration_bounds = array<i64: 2>, scalar_prefetch = 0 : i64, scratch_operands = 2 : i64, tpu.core_type = #tpu.core_type<tc>, window_params = [{transform_indices = @transform_0, window_bounds = array<i64: 1, 16, 64>}, {pipeline_mode = #tpu.pipeline_mode<synchronous>, transform_indices = @transform_1, window_bounds = array<i64: 1, 64>}, {pipeline_mode = #tpu.pipeline_mode<synchronous>, transform_indices = @transform_2, window_bounds = array<i64: 1, 64>}, {pipeline_mode = #tpu.pipeline_mode<synchronous>, transform_indices = @transform_3, window_bounds = array<i64: 3, 64, 256>}, {pipeline_mode = #tpu.pipeline_mode<synchronous>, transform_indices = @transform_4, window_bounds = array<i64: 1, 256>}, {pipeline_mode = #tpu.pipeline_mode<synchronous>, transform_indices = @transform_5, window_bounds = array<i64: 1, 256>}, {pipeline_mode = #tpu.pipeline_mode<synchronous>, transform_indices = @transform_6, window_bounds = array<i64: 3, 256, 128>}, {pipeline_mode = #tpu.pipeline_mode<synchronous>, transform_indices = @transform_7, window_bounds = array<i64: 64, 128>}, {transform_indices = @transform_8, window_bounds = array<i64: 1, 16, 128>}]} {
    %cst = arith.constant 0.000000e+00 : f32
    %0 = vector.broadcast %cst : f32 to vector<1x1x64xf32>
    %c0 = arith.constant 0 : index
    %c0_0 = arith.constant 0 : index
    %c0_1 = arith.constant 0 : index
    %1 = vector.load %arg10[%c0, %c0_0, %c0_1] : memref<1x18x64xf32, #tpu.memory_space<vmem>>, vector<1x1x64xf32>
    tpu.vector_store %arg10[%c0, %c0_0, %c0_1], %0 {strides = array<i32>} : memref<1x18x64xf32, #tpu.memory_space<vmem>>, vector<1x1x64xf32>,
    %c0_2 = arith.constant 0 : index
    %c17 = arith.constant 17 : index
    %c0_3 = arith.constant 0 : index
    %2 = vector.load %arg10[%c0_2, %c17, %c0_3] : memref<1x18x64xf32, #tpu.memory_space<vmem>>, vector<1x1x64xf32>
    tpu.vector_store %arg10[%c0_2, %c17, %c0_3], %0 {strides = array<i32>} : memref<1x18x64xf32, #tpu.memory_space<vmem>>, vector<1x1x64xf32>,
    %cst_4 = arith.constant 0.000000e+00 : f32
    %3 = vector.broadcast %cst_4 : f32 to vector<1x1x256xf32>
    %c0_5 = arith.constant 0 : index
    %c0_6 = arith.constant 0 : index
    %c0_7 = arith.constant 0 : index
    %4 = vector.load %arg11[%c0_5, %c0_6, %c0_7] : memref<1x18x256xf32, #tpu.memory_space<vmem>>, vector<1x1x256xf32>
    tpu.vector_store %arg11[%c0_5, %c0_6, %c0_7], %3 {strides = array<i32>} : memref<1x18x256xf32, #tpu.memory_space<vmem>>, vector<1x1x256xf32>,
    %c0_8 = arith.constant 0 : index
    %c17_9 = arith.constant 17 : index
    %c0_10 = arith.constant 0 : index
    %5 = vector.load %arg11[%c0_8, %c17_9, %c0_10] : memref<1x18x256xf32, #tpu.memory_space<vmem>>, vector<1x1x256xf32>
    tpu.vector_store %arg11[%c0_8, %c17_9, %c0_10], %3 {strides = array<i32>} : memref<1x18x256xf32, #tpu.memory_space<vmem>>, vector<1x1x256xf32>,
    %c0_11 = arith.constant 0 : index
    %c0_12 = arith.constant 0 : index
    %c0_13 = arith.constant 0 : index
    %6 = vector.load %arg1[%c0_11, %c0_12, %c0_13] : memref<1x16x64xf32, #tpu.memory_space<vmem>>, vector<1x16x64xf32>
    %7 = vector.shape_cast %6 : vector<1x16x64xf32> to vector<16x64xf32>
    %c0_14 = arith.constant 0 : index
    %c0_15 = arith.constant 0 : index
    %8 = vector.load %arg2[%c0_14, %c0_15] : memref<1x64xf32, #tpu.memory_space<vmem>>, vector<1x64xf32>
    %9 = vector.broadcast %8 : vector<1x64xf32> to vector<16x64xf32>
    %10 = arith.mulf %7, %9 : vector<16x64xf32>
    %c0_16 = arith.constant 0 : index
    %c0_17 = arith.constant 0 : index
    %11 = vector.load %arg3[%c0_16, %c0_17] : memref<1x64xf32, #tpu.memory_space<vmem>>, vector<1x64xf32>
    %12 = vector.broadcast %11 : vector<1x64xf32> to vector<16x64xf32>
    %13 = arith.addf %10, %12 : vector<16x64xf32>
    %cst_18 = arith.constant 0.000000e+00 : f32
    %14 = vector.broadcast %cst_18 : f32 to vector<16x64xf32>
    %15 = arith.maximumf %13, %14 : vector<16x64xf32>
    %16 = vector.shape_cast %15 : vector<16x64xf32> to vector<1x16x64xf32>
    %c0_19 = arith.constant 0 : index
    %c1 = arith.constant 1 : index
    %c0_20 = arith.constant 0 : index
    %17 = vector.load %arg10[%c0_19, %c1, %c0_20] : memref<1x18x64xf32, #tpu.memory_space<vmem>>, vector<1x16x64xf32>
    tpu.vector_store %arg10[%c0_19, %c1, %c0_20], %16 {strides = array<i32>} : memref<1x18x64xf32, #tpu.memory_space<vmem>>, vector<1x16x64xf32>,
    %cst_21 = arith.constant 0.000000e+00 : f32
    %18 = vector.broadcast %cst_21 : f32 to vector<16x256xf32>
    %c0_22 = arith.constant 0 : index
    %c0_23 = arith.constant 0 : index
    %c0_24 = arith.constant 0 : index
    %19 = vector.load %arg10[%c0_22, %c0_23, %c0_24] : memref<1x18x64xf32, #tpu.memory_space<vmem>>, vector<1x16x64xf32>
    %20 = vector.shape_cast %19 : vector<1x16x64xf32> to vector<16x64xf32>
    %c0_25 = arith.constant 0 : index
    %c0_26 = arith.constant 0 : index
    %c0_27 = arith.constant 0 : index
    %21 = vector.load %arg4[%c0_25, %c0_26, %c0_27] : memref<3x64x256xf32, #tpu.memory_space<vmem>>, vector<1x64x256xf32>
    %22 = vector.shape_cast %21 : vector<1x64x256xf32> to vector<64x256xf32>
    %cst_28 = arith.constant dense<0.000000e+00> : vector<16x256xf32>
    %23 = tpu.matmul %20, %22, %cst_28 {dimension_numbers = #tpu.dot_dimension_numbers<[1], [0], [0], [1], [0, 0, 1, 1], [], []>} : vector<16x64xf32>, vector<64x256xf32>, vector<16x256xf32> -> vector<16x256xf32>
    %24 = arith.addf %18, %23 : vector<16x256xf32>
    %c0_29 = arith.constant 0 : index
    %c1_30 = arith.constant 1 : index
    %c0_31 = arith.constant 0 : index
    %25 = vector.load %arg10[%c0_29, %c1_30, %c0_31] : memref<1x18x64xf32, #tpu.memory_space<vmem>>, vector<1x16x64xf32>
    %26 = vector.shape_cast %25 : vector<1x16x64xf32> to vector<16x64xf32>
    %c1_32 = arith.constant 1 : index
    %c0_33 = arith.constant 0 : index
    %c0_34 = arith.constant 0 : index
    %27 = vector.load %arg4[%c1_32, %c0_33, %c0_34] : memref<3x64x256xf32, #tpu.memory_space<vmem>>, vector<1x64x256xf32>
    %28 = vector.shape_cast %27 : vector<1x64x256xf32> to vector<64x256xf32>
    %cst_35 = arith.constant dense<0.000000e+00> : vector<16x256xf32>
    %29 = tpu.matmul %26, %28, %cst_35 {dimension_numbers = #tpu.dot_dimension_numbers<[1], [0], [0], [1], [0, 0, 1, 1], [], []>} : vector<16x64xf32>, vector<64x256xf32>, vector<16x256xf32> -> vector<16x256xf32>
    %30 = arith.addf %24, %29 : vector<16x256xf32>
    %c0_36 = arith.constant 0 : index
    %c2 = arith.constant 2 : index
    %c0_37 = arith.constant 0 : index
    %31 = vector.load %arg10[%c0_36, %c2, %c0_37] : memref<1x18x64xf32, #tpu.memory_space<vmem>>, vector<1x16x64xf32>
    %32 = vector.shape_cast %31 : vector<1x16x64xf32> to vector<16x64xf32>
    %c2_38 = arith.constant 2 : index
    %c0_39 = arith.constant 0 : index
    %c0_40 = arith.constant 0 : index
    %33 = vector.load %arg4[%c2_38, %c0_39, %c0_40] : memref<3x64x256xf32, #tpu.memory_space<vmem>>, vector<1x64x256xf32>
    %34 = vector.shape_cast %33 : vector<1x64x256xf32> to vector<64x256xf32>
    %cst_41 = arith.constant dense<0.000000e+00> : vector<16x256xf32>
    %35 = tpu.matmul %32, %34, %cst_41 {dimension_numbers = #tpu.dot_dimension_numbers<[1], [0], [0], [1], [0, 0, 1, 1], [], []>} : vector<16x64xf32>, vector<64x256xf32>, vector<16x256xf32> -> vector<16x256xf32>
    %36 = arith.addf %30, %35 : vector<16x256xf32>
    %c0_42 = arith.constant 0 : index
    %c0_43 = arith.constant 0 : index
    %37 = vector.load %arg5[%c0_42, %c0_43] : memref<1x256xf32, #tpu.memory_space<vmem>>, vector<1x256xf32>
    %38 = vector.broadcast %37 : vector<1x256xf32> to vector<16x256xf32>
    %39 = arith.mulf %36, %38 : vector<16x256xf32>
    %c0_44 = arith.constant 0 : index
    %c0_45 = arith.constant 0 : index
    %40 = vector.load %arg6[%c0_44, %c0_45] : memref<1x256xf32, #tpu.memory_space<vmem>>, vector<1x256xf32>
    %41 = vector.broadcast %40 : vector<1x256xf32> to vector<16x256xf32>
    %42 = arith.addf %39, %41 : vector<16x256xf32>
    %cst_46 = arith.constant 0.000000e+00 : f32
    %43 = vector.broadcast %cst_46 : f32 to vector<16x256xf32>
    %44 = arith.maximumf %42, %43 : vector<16x256xf32>
    %45 = vector.shape_cast %44 : vector<16x256xf32> to vector<1x16x256xf32>
    %c0_47 = arith.constant 0 : index
    %c1_48 = arith.constant 1 : index
    %c0_49 = arith.constant 0 : index
    %46 = vector.load %arg11[%c0_47, %c1_48, %c0_49] : memref<1x18x256xf32, #tpu.memory_space<vmem>>, vector<1x16x256xf32>
    tpu.vector_store %arg11[%c0_47, %c1_48, %c0_49], %45 {strides = array<i32>} : memref<1x18x256xf32, #tpu.memory_space<vmem>>, vector<1x16x256xf32>,
    %cst_50 = arith.constant 0.000000e+00 : f32
    %47 = vector.broadcast %cst_50 : f32 to vector<16x128xf32>
    %c0_51 = arith.constant 0 : index
    %c0_52 = arith.constant 0 : index
    %c0_53 = arith.constant 0 : index
    %48 = vector.load %arg11[%c0_51, %c0_52, %c0_53] : memref<1x18x256xf32, #tpu.memory_space<vmem>>, vector<1x16x256xf32>
    %49 = vector.shape_cast %48 : vector<1x16x256xf32> to vector<16x256xf32>
    %c0_54 = arith.constant 0 : index
    %c0_55 = arith.constant 0 : index
    %c0_56 = arith.constant 0 : index
    %50 = vector.load %arg7[%c0_54, %c0_55, %c0_56] : memref<3x256x128xf32, #tpu.memory_space<vmem>>, vector<1x256x128xf32>
    %51 = vector.shape_cast %50 : vector<1x256x128xf32> to vector<256x128xf32>
    %cst_57 = arith.constant dense<0.000000e+00> : vector<16x128xf32>
    %52 = tpu.matmul %49, %51, %cst_57 {dimension_numbers = #tpu.dot_dimension_numbers<[1], [0], [0], [1], [0, 0, 1, 1], [], []>} : vector<16x256xf32>, vector<256x128xf32>, vector<16x128xf32> -> vector<16x128xf32>
    %53 = arith.addf %47, %52 : vector<16x128xf32>
    %c0_58 = arith.constant 0 : index
    %c1_59 = arith.constant 1 : index
    %c0_60 = arith.constant 0 : index
    %54 = vector.load %arg11[%c0_58, %c1_59, %c0_60] : memref<1x18x256xf32, #tpu.memory_space<vmem>>, vector<1x16x256xf32>
    %55 = vector.shape_cast %54 : vector<1x16x256xf32> to vector<16x256xf32>
    %c1_61 = arith.constant 1 : index
    %c0_62 = arith.constant 0 : index
    %c0_63 = arith.constant 0 : index
    %56 = vector.load %arg7[%c1_61, %c0_62, %c0_63] : memref<3x256x128xf32, #tpu.memory_space<vmem>>, vector<1x256x128xf32>
    %57 = vector.shape_cast %56 : vector<1x256x128xf32> to vector<256x128xf32>
    %cst_64 = arith.constant dense<0.000000e+00> : vector<16x128xf32>
    %58 = tpu.matmul %55, %57, %cst_64 {dimension_numbers = #tpu.dot_dimension_numbers<[1], [0], [0], [1], [0, 0, 1, 1], [], []>} : vector<16x256xf32>, vector<256x128xf32>, vector<16x128xf32> -> vector<16x128xf32>
    %59 = arith.addf %53, %58 : vector<16x128xf32>
    %c0_65 = arith.constant 0 : index
    %c2_66 = arith.constant 2 : index
    %c0_67 = arith.constant 0 : index
    %60 = vector.load %arg11[%c0_65, %c2_66, %c0_67] : memref<1x18x256xf32, #tpu.memory_space<vmem>>, vector<1x16x256xf32>
    %61 = vector.shape_cast %60 : vector<1x16x256xf32> to vector<16x256xf32>
    %c2_68 = arith.constant 2 : index
    %c0_69 = arith.constant 0 : index
    %c0_70 = arith.constant 0 : index
    %62 = vector.load %arg7[%c2_68, %c0_69, %c0_70] : memref<3x256x128xf32, #tpu.memory_space<vmem>>, vector<1x256x128xf32>
    %63 = vector.shape_cast %62 : vector<1x256x128xf32> to vector<256x128xf32>
    %cst_71 = arith.constant dense<0.000000e+00> : vector<16x128xf32>
    %64 = tpu.matmul %61, %63, %cst_71 {dimension_numbers = #tpu.dot_dimension_numbers<[1], [0], [0], [1], [0, 0, 1, 1], [], []>} : vector<16x256xf32>, vector<256x128xf32>, vector<16x128xf32> -> vector<16x128xf32>
    %65 = arith.addf %59, %64 : vector<16x128xf32>
    %c0_72 = arith.constant 0 : index
    %c1_73 = arith.constant 1 : index
    %c0_74 = arith.constant 0 : index
    %66 = vector.load %arg10[%c0_72, %c1_73, %c0_74] : memref<1x18x64xf32, #tpu.memory_space<vmem>>, vector<1x16x64xf32>
    %67 = vector.shape_cast %66 : vector<1x16x64xf32> to vector<16x64xf32>
    %c0_75 = arith.constant 0 : index
    %c0_76 = arith.constant 0 : index
    %68 = vector.load %arg8[%c0_75, %c0_76] : memref<64x128xf32, #tpu.memory_space<vmem>>, vector<64x128xf32>
    %cst_77 = arith.constant dense<0.000000e+00> : vector<16x128xf32>
    %69 = tpu.matmul %67, %68, %cst_77 {dimension_numbers = #tpu.dot_dimension_numbers<[1], [0], [0], [1], [0, 0, 1, 1], [], []>} : vector<16x64xf32>, vector<64x128xf32>, vector<16x128xf32> -> vector<16x128xf32>
    %70 = arith.addf %65, %69 : vector<16x128xf32>
    %71 = vector.shape_cast %70 : vector<16x128xf32> to vector<1x16x128xf32>
    %c0_78 = arith.constant 0 : index
    %c0_79 = arith.constant 0 : index
    %c0_80 = arith.constant 0 : index
    %72 = vector.load %arg9[%c0_78, %c0_79, %c0_80] : memref<1x16x128xf32, #tpu.memory_space<vmem>>, vector<1x16x128xf32>
    tpu.vector_store %arg9[%c0_78, %c0_79, %c0_80], %71 {strides = array<i32>} : memref<1x16x128xf32, #tpu.memory_space<vmem>>, vector<1x16x128xf32>,
    return
  }
  func.func @transform_0(%arg0: i32) -> (i32, i32, i32) {
    %c0_i32 = arith.constant 0 : i32
    %c0_i32_0 = arith.constant 0 : i32
    %c0_i32_1 = arith.constant 0 : i32
    return %arg0, %c0_i32, %c0_i32_0 : i32, i32, i32
  }
  func.func @transform_1(%arg0: i32) -> (i32, i32) {
    %c0_i32 = arith.constant 0 : i32
    %c0_i32_0 = arith.constant 0 : i32
    %c0_i32_1 = arith.constant 0 : i32
    return %c0_i32, %c0_i32_0 : i32, i32
  }
  func.func @transform_2(%arg0: i32) -> (i32, i32) {
    %c0_i32 = arith.constant 0 : i32
    %c0_i32_0 = arith.constant 0 : i32
    %c0_i32_1 = arith.constant 0 : i32
    return %c0_i32, %c0_i32_0 : i32, i32
  }
  func.func @transform_3(%arg0: i32) -> (i32, i32, i32) {
    %c0_i32 = arith.constant 0 : i32
    %c0_i32_0 = arith.constant 0 : i32
    %c0_i32_1 = arith.constant 0 : i32
    %c0_i32_2 = arith.constant 0 : i32
    return %c0_i32, %c0_i32_0, %c0_i32_1 : i32, i32, i32
  }
  func.func @transform_4(%arg0: i32) -> (i32, i32) {
    %c0_i32 = arith.constant 0 : i32
    %c0_i32_0 = arith.constant 0 : i32
    %c0_i32_1 = arith.constant 0 : i32
    return %c0_i32, %c0_i32_0 : i32, i32
  }
  func.func @transform_5(%arg0: i32) -> (i32, i32) {
    %c0_i32 = arith.constant 0 : i32
    %c0_i32_0 = arith.constant 0 : i32
    %c0_i32_1 = arith.constant 0 : i32
    return %c0_i32, %c0_i32_0 : i32, i32
  }
  func.func @transform_6(%arg0: i32) -> (i32, i32, i32) {
    %c0_i32 = arith.constant 0 : i32
    %c0_i32_0 = arith.constant 0 : i32
    %c0_i32_1 = arith.constant 0 : i32
    %c0_i32_2 = arith.constant 0 : i32
    return %c0_i32, %c0_i32_0, %c0_i32_1 : i32, i32, i32
  }
  func.func @transform_7(%arg0: i32) -> (i32, i32) {
    %c0_i32 = arith.constant 0 : i32
    %c0_i32_0 = arith.constant 0 : i32
    %c0_i32_1 = arith.constant 0 : i32
    return %c0_i32, %c0_i32_0 : i32, i32
  }
  func.func @transform_8(%arg0: i32) -> (i32, i32, i32) {
    %c0_i32 = arith.constant 0 : i32
    %c0_i32_0 = arith.constant 0 : i32
    %c0_i32_1 = arith.constant 0 : i32
    return %arg0, %c0_i32, %c0_i32_0 : i32, i32, i32
  }
}

</mosaic_0001>

<llo_original>
// kernel: tile.33
$region0: #{tile.33}
  #allocation0 [shape = 's32[1]{0}', space=sflag, size = 0x4, scoped, tag = 'scoped memory for tile.33']
  %s0 = inlined_call_operand.vmem [shape: f32[16], index: 0, kind: input, shape index: {}]
  %s1 = inlined_call_operand.vmem [shape: f32[16,16], index: 1, kind: output, shape index: {}]
  // Predicated region
  $region2: #{tile.33} parent=0 // pred_check
    _
  $region3: #{tile.33} parent=0 // pred_check_branch
    %3 = sbr.rel (0) target = $region5
  $region4: #{tile.33} parent=0 // pred_region
    _
  $region5: #{tile.33} parent=0 // pred_fallthru
    _
  %v4 = vld [vmem:[%s0] ss:$0 sm:$0xff]
  %5 = vst [vmem:[%s1] sm:$0xff] %v4
  %s6 = scalar_lea.vmem %s1, 8
  %7 = vst [vmem:[%s6] sm:$0xff] %v4

// kernel: tile.34
$region0: #{tile.34}
  %s0 = inlined_call_operand.vmem [shape: f32[16,16], index: 0, kind: input, shape index: {}]
  %s1 = inlined_call_operand.vmem [shape: f32[1,256], index: 1, kind: output, shape index: {}]
  $region1: #{tile.34} parent=0
    #allocation0 [shape = 'u8[8192]{0}', space=vmem, size = 0x2000, scoped, tag = 'scoped mem for output reshape']
    %s2 = smov 3
    %v3 = vld [vmem:[%s0] ss:$8 sm:%s2]
    %vm4 = vcmask 130048
    %5 = vst.msk [vmem:[#allocation0] ss:$8 sm:$0x3] %vm4, %v3
    %s6 = scalar_lea.vmem %s0, 7
    %s7 = smov 3
    %v8 = vld [vmem:[%s6] ss:$8 sm:%s7]
    %9 = vrot.lane.b32.xlu0 %v8, 112
    %v10 = vpop.permute.xlu0 %9
    %vm11 = vcmask 1048448
    %12 = vst.msk [vmem:[#allocation0] ss:$8 sm:$0x3] %vm11, %v10
    %s13 = scalar_lea.vmem %s0, 6
    %s14 = smov 3
    %v15 = vld [vmem:[%s13] ss:$8 sm:%s14]
    %16 = vrot.lane.b32.xlu0 %v15, 96
    %v17 = vpop.permute.xlu0 %16
    %vm18 = vcmask 917248
    %19 = vst.msk [vmem:[#allocation0] ss:$8 sm:$0x3] %vm18, %v17
    %s20 = scalar_lea.vmem %s0, 5
    %s21 = smov 3
    %v22 = vld [vmem:[%s20] ss:$8 sm:%s21]
    %23 = vrot.lane.b32.xlu0 %v22, 80
    %v24 = vpop.permute.xlu0 %23
    %vm25 = vcmask 786048
    %26 = vst.msk [vmem:[#allocation0] ss:$8 sm:$0x3] %vm25, %v24
    %s27 = scalar_lea.vmem %s0, 4
    %s28 = smov 3
    %v29 = vld [vmem:[%s27] ss:$8 sm:%s28]
    %30 = vrot.lane.b32.xlu0 %v29, 64
    %v31 = vpop.permute.xlu0 %30
    %vm32 = vcmask 654848
    %33 = vst.msk [vmem:[#allocation0] ss:$8 sm:$0x3] %vm32, %v31
    %s34 = scalar_lea.vmem %s0, 3
    %s35 = smov 3
    %v36 = vld [vmem:[%s34] ss:$8 sm:%s35]
    %37 = vrot.lane.b32.xlu0 %v36, 48
    %v38 = vpop.permute.xlu0 %37
    %vm39 = vcmask 523648
    %40 = vst.msk [vmem:[#allocation0] ss:$8 sm:$0x3] %vm39, %v38
    %s41 = scalar_lea.vmem %s0, 2
    %s42 = smov 3
    %v43 = vld [vmem:[%s41] ss:$8 sm:%s42]
    %44 = vrot.lane.b32.xlu0 %v43, 32
    %v45 = vpop.permute.xlu0 %44
    %vm46 = vcmask 392448
    %47 = vst.msk [vmem:[#allocation0] ss:$8 sm:$0x3] %vm46, %v45
    %s48 = scalar_lea.vmem %s0, 1
    %s49 = smov 3
    %v50 = vld [vmem:[%s48] ss:$8 sm:%s49]
    %51 = vrot.lane.b32.xlu0 %v50, 16
    %v52 = vpop.permute.xlu0 %51
    %vm53 = vcmask 261248
    %54 = vst.msk [vmem:[#allocation0] ss:$8 sm:$0x3] %vm53, %v52
    %s56 = sshllo.u32 0, 1
    %v58 = vld [vmem:[#allocation0] sm:%s56]
    %s59 = sshllo.u32 0, 1
    %60 = vst [vmem:[%s1] sm:%s59] %v58
    %s61 = scalar_lea.vmem [#allocation0], 8
    %v62 = vld [vmem:[%s61] sm:%s56]
    %s63 = sshllo.u32 0, 1
    %s64 = scalar_lea.vmem %s1, 1
    %65 = vst [vmem:[%s64] sm:%s63] %v62

// kernel: tile.23
$region0: #{tile.23}
  #allocation0 [shape = 's32[1]{0}', space=sflag, size = 0x4, scoped, tag = 'scoped memory for tile.23']
  %s0 = inlined_call_operand.vmem [shape: f32[4], index: 0, kind: input, shape index: {}]
  %s1 = inlined_call_operand.vmem [shape: f32[16,4], index: 1, kind: output, shape index: {}]
  // Predicated region
  $region2: #{tile.23} parent=0 // pred_check
    _
  $region3: #{tile.23} parent=0 // pred_check_branch
    %3 = sbr.rel (0) target = $region5
  $region4: #{tile.23} parent=0 // pred_region
    _
  $region5: #{tile.23} parent=0 // pred_fallthru
    _
  %v4 = vld [vmem:[%s0] ss:$0 sm:$0xff]
  %5 = vst [vmem:[%s1] sm:$0xff] %v4
  %s6 = scalar_lea.vmem %s1, 8
  %7 = vst [vmem:[%s6] sm:$0xff] %v4

// kernel: tile.24
$region0: #{tile.24}
  %s0 = inlined_call_operand.vmem [shape: f32[16,4], index: 0, kind: input, shape index: {}]
  %s1 = inlined_call_operand.vmem [shape: f32[1,64], index: 1, kind: output, shape index: {}]
  $region1: #{tile.24} parent=0
    #allocation0 [shape = 'u8[4096]{0}', space=vmem, size = 0x1000, scoped, tag = 'scoped mem for output reshape']
    %v2 = vld [vmem:[%s0] sm:$0x1]
    %vm3 = vcmask 31744
    %4 = vst.msk [vmem:[#allocation0] sm:$0x1] %vm3, %v2
    %s5 = scalar_lea.vmem %s0, 15
    %v6 = vld [vmem:[%s5] sm:$0x1]
    %7 = vrot.lane.b32.xlu0 %v6, 60
    %v8 = vpop.permute.xlu0 %7
    %vm9 = vcmask 523744
    %10 = vst.msk [vmem:[#allocation0] sm:$0x1] %vm9, %v8
    %s11 = scalar_lea.vmem %s0, 14
    %v12 = vld [vmem:[%s11] sm:$0x1]
    %13 = vrot.lane.b32.xlu0 %v12, 56
    %v14 = vpop.permute.xlu0 %13
    %vm15 = vcmask 490944
    %16 = vst.msk [vmem:[#allocation0] sm:$0x1] %vm15, %v14
    %s17 = scalar_lea.vmem %s0, 13
    %v18 = vld [vmem:[%s17] sm:$0x1]
    %19 = vrot.lane.b32.xlu0 %v18, 52
    %v20 = vpop.permute.xlu0 %19
    %vm21 = vcmask 458144
    %22 = vst.msk [vmem:[#allocation0] sm:$0x1] %vm21, %v20
    %s23 = scalar_lea.vmem %s0, 12
    %v24 = vld [vmem:[%s23] sm:$0x1]
    %25 = vrot.lane.b32.xlu0 %v24, 48
    %v26 = vpop.permute.xlu0 %25
    %vm27 = vcmask 425344
    %28 = vst.msk [vmem:[#allocation0] sm:$0x1] %vm27, %v26
    %s29 = scalar_lea.vmem %s0, 11
    %v30 = vld [vmem:[%s29] sm:$0x1]
    %31 = vrot.lane.b32.xlu0 %v30, 44
    %v32 = vpop.permute.xlu0 %31
    %vm33 = vcmask 392544
    %34 = vst.msk [vmem:[#allocation0] sm:$0x1] %vm33, %v32
    %s35 = scalar_lea.vmem %s0, 10
    %v36 = vld [vmem:[%s35] sm:$0x1]
    %37 = vrot.lane.b32.xlu0 %v36, 40
    %v38 = vpop.permute.xlu0 %37
    %vm39 = vcmask 359744
    %40 = vst.msk [vmem:[#allocation0] sm:$0x1] %vm39, %v38
    %s41 = scalar_lea.vmem %s0, 9
    %v42 = vld [vmem:[%s41] sm:$0x1]
    %43 = vrot.lane.b32.xlu0 %v42, 36
    %v44 = vpop.permute.xlu0 %43
    %vm45 = vcmask 326944
    %46 = vst.msk [vmem:[#allocation0] sm:$0x1] %vm45, %v44
    %s47 = scalar_lea.vmem %s0, 8
    %v48 = vld [vmem:[%s47] sm:$0x1]
    %49 = vrot.lane.b32.xlu0 %v48, 32
    %v50 = vpop.permute.xlu0 %49
    %vm51 = vcmask 294144
    %52 = vst.msk [vmem:[#allocation0] sm:$0x1] %vm51, %v50
    %s53 = scalar_lea.vmem %s0, 7
    %v54 = vld [vmem:[%s53] sm:$0x1]
    %55 = vrot.lane.b32.xlu0 %v54, 28
    %v56 = vpop.permute.xlu0 %55
    %vm57 = vcmask 261344
    %58 = vst.msk [vmem:[#allocation0] sm:$0x1] %vm57, %v56
    %s59 = scalar_lea.vmem %s0, 6
    %v60 = vld [vmem:[%s59] sm:$0x1]
    %61 = vrot.lane.b32.xlu0 %v60, 24
    %v62 = vpop.permute.xlu0 %61
    %vm63 = vcmask 228544
    %64 = vst.msk [vmem:[#allocation0] sm:$0x1] %vm63, %v62
    %s65 = scalar_lea.vmem %s0, 5
    %v66 = vld [vmem:[%s65] sm:$0x1]
    %67 = vrot.lane.b32.xlu0 %v66, 20
    %v68 = vpop.permute.xlu0 %67
    %vm69 = vcmask 195744
    %70 = vst.msk [vmem:[#allocation0] sm:$0x1] %vm69, %v68
    %s71 = scalar_lea.vmem %s0, 4
    %v72 = vld [vmem:[%s71] sm:$0x1]
    %73 = vrot.lane.b32.xlu0 %v72, 16
    %v74 = vpop.permute.xlu0 %73
    %vm75 = vcmask 162944
    %76 = vst.msk [vmem:[#allocation0] sm:$0x1] %vm75, %v74
    %s77 = scalar_lea.vmem %s0, 3
    %v78 = vld [vmem:[%s77] sm:$0x1]
    %79 = vrot.lane.b32.xlu0 %v78, 12
    %v80 = vpop.permute.xlu0 %79
    %vm81 = vcmask 130144
    %82 = vst.msk [vmem:[#allocation0] sm:$0x1] %vm81, %v80
    %s83 = scalar_lea.vmem %s0, 2
    %v84 = vld [vmem:[%s83] sm:$0x1]
    %85 = vrot.lane.b32.xlu0 %v84, 8
    %v86 = vpop.permute.xlu0 %85
    %vm87 = vcmask 97344
    %88 = vst.msk [vmem:[#allocation0] sm:$0x1] %vm87, %v86
    %s89 = scalar_lea.vmem %s0, 1
    %v90 = vld [vmem:[%s89] sm:$0x1]
    %91 = vrot.lane.b32.xlu0 %v90, 4
    %v92 = vpop.permute.xlu0 %91
    %vm93 = vcmask 64544
    %94 = vst.msk [vmem:[#allocation0] sm:$0x1] %vm93, %v92
    %s96 = sshllo.u32 0, 1
    %v98 = vld [vmem:[#allocation0] sm:%s96]
    %s99 = sshllo.u32 0, 1
    %100 = vst [vmem:[%s1] sm:%s99] %v98

// kernel: wide_basic_forward.1
$region0: #{wide_basic_forward.1}
  #allocation0 [shape = 'u32[]', space=smem, size = 0x4, offset = 0x4, fixed_abs, tag = 'smem constant byte address 0x4 - core index']
  #allocation1 [shape = 'u32[144,128]{1,0:T(1,128)}', space=vmem, size = 0x12000, scoped, tag = 'internal scratch']
  #allocation2 [shape = 'f32[1,18,64]{2,1,0:T(8,128)}', space=vmem, size = 0x3000, scoped, tag = 'scratch operand']
  #allocation3 [shape = 'f32[1,18,256]{2,1,0:T(8,128)}', space=vmem, size = 0x6000, scoped, tag = 'scratch operand']
  %s0 = inlined_call_operand.vmem [shape: f32[2,16,64], index: 0, kind: input, shape index: {}]
  %s1 = inlined_call_operand.vmem [shape: f32[1,64], index: 1, kind: input, shape index: {}]
  %s2 = inlined_call_operand.vmem [shape: f32[1,64], index: 2, kind: input, shape index: {}]
  %s3 = inlined_call_operand.vmem [shape: f32[3,64,256], index: 3, kind: input, shape index: {}]
  %s4 = inlined_call_operand.vmem [shape: f32[1,256], index: 4, kind: input, shape index: {}]
  %s5 = inlined_call_operand.vmem [shape: f32[1,256], index: 5, kind: input, shape index: {}]
  %s6 = inlined_call_operand.vmem [shape: f32[3,256,128], index: 6, kind: input, shape index: {}]
  %s7 = inlined_call_operand.vmem [shape: f32[64,128], index: 7, kind: input, shape index: {}]
  %s8 = inlined_call_operand.vmem [shape: f32[2,16,128], index: 8, kind: output, shape index: {}]
  %s9 = sld [smem:[#allocation0]]
  $region65: #{wide_basic_forward.1} parent=0
    _
  %s11 = ssub.s32 1, %s9
  %s12 = scalar_select 0, %s11, %s9
  loop: start=0, step=1, limit=4
  $region2: #{wide_basic_forward.1} parent=0 // loop_pre_header
    _
  $region3: #{wide_basic_forward.1} parent=0 // loop_header
    %s14 = sphi 0, %s18
    %p15 = scmp.ge.s32.totalorder %s14, 4
    %s24 = sphi 0, %s26
    %s27 = sphi 0, %s24
    %s28 = sphi 0, %s27
    %s44 = sphi 0, %s28
    %s48 = sphi 0, %s48
    %s50 = sphi 0, %s48
    %s51 = sphi 0, %s50
    %s65 = sphi 0, %s51
    %s69 = sphi 0, %s69
    %s71 = sphi 0, %s69
    %s72 = sphi 0, %s71
    %s86 = sphi 0, %s72
    %s90 = sphi 0, %s90
    %s92 = sphi 0, %s90
    %s93 = sphi 0, %s92
    %s107 = sphi 0, %s93
    %s111 = sphi 0, %s111
    %s113 = sphi 0, %s111
    %s114 = sphi 0, %s113
    %s128 = sphi 0, %s114
    %s132 = sphi 0, %s132
    %s134 = sphi 0, %s132
    %s135 = sphi 0, %s134
    %s149 = sphi 0, %s135
    %s153 = sphi 0, %s153
    %s155 = sphi 0, %s153
    %s156 = sphi 0, %s155
    %s170 = sphi 0, %s156
    %s174 = sphi 0, %s174
    %s176 = sphi 0, %s174
    %s177 = sphi 0, %s176
    %s191 = sphi 0, %s177
    %s197 = sphi 0, %s199
    %s200 = sphi 0, %s197
    %s201 = sphi 0, %s200
    %s217 = sphi 0, %s201
  $region4: #{wide_basic_forward.1} parent=0 // loop_header_branch
    %17 = sbr.rel (%p15) target = $region8
  $region5: #{wide_basic_forward.1} parent=0 // loop_body
    %s19 = ssub.s32 %s14, 1
    %s20 = ssub.s32 %s14, 2
    %s21 = sadd.s32 %s14, 1
    %s22 = ssub.s32 %s14, %s21
    %p23 = scmp.eq.s32.totalorder %s22, 0
    %s25 = sadd.s32 %s24, 1
    %s26 = scalar_select %p23, %s24, %s25
    %p29 = pneg %p23
    %p30 = scmp.eq.s32.totalorder %s14, 1
    %p31 = por %p29, %p30
    %p32 = scmp.ne.s32.totalorder %s24, %s27
    %p33 = scmp.eq.s32.totalorder %s14, 0
    %p34 = por %p32, %p33
    %p35 = scmp.ne.s32.totalorder %s24, %s27
    %p36 = scmp.eq.s32.totalorder %s19, 1
    %p37 = por %p35, %p36
    %p38 = scmp.ne.s32.totalorder %s27, %s28
    %p39 = scmp.eq.s32.totalorder %s19, 0
    %p40 = por %p38, %p39
    %p41 = scmp.ne.s32.totalorder %s27, %s28
    %p42 = scmp.eq.s32.totalorder %s20, 1
    %p43 = por %p41, %p42
    %p45 = scmp.ne.s32.totalorder %s28, %s44
    %p46 = scmp.eq.s32.totalorder %s20, 0
    %p47 = por %p45, %p46
    %s49 = sadd.s32 %s48, 1
    %p52 = scmp.eq.s32.totalorder %s14, 1
    %p53 = scmp.ne.s32.totalorder %s48, %s50
    %p54 = scmp.eq.s32.totalorder %s14, 0
    %p55 = por %p53, %p54
    %p56 = scmp.ne.s32.totalorder %s48, %s50
    %p57 = scmp.eq.s32.totalorder %s19, 1
    %p58 = por %p56, %p57
    %p59 = scmp.ne.s32.totalorder %s50, %s51
    %p60 = scmp.eq.s32.totalorder %s19, 0
    %p61 = por %p59, %p60
    %p62 = scmp.ne.s32.totalorder %s50, %s51
    %p63 = scmp.eq.s32.totalorder %s20, 1
    %p64 = por %p62, %p63
    %p66 = scmp.ne.s32.totalorder %s51, %s65
    %p67 = scmp.eq.s32.totalorder %s20, 0
    %p68 = por %p66, %p67
    %s70 = sadd.s32 %s69, 1
    %p73 = scmp.eq.s32.totalorder %s14, 1
    %p74 = scmp.ne.s32.totalorder %s69, %s71
    %p75 = scmp.eq.s32.totalorder %s14, 0
    %p76 = por %p74, %p75
    %p77 = scmp.ne.s32.totalorder %s69, %s71
    %p78 = scmp.eq.s32.totalorder %s19, 1
    %p79 = por %p77, %p78
    %p80 = scmp.ne.s32.totalorder %s71, %s72
    %p81 = scmp.eq.s32.totalorder %s19, 0
    %p82 = por %p80, %p81
    %p83 = scmp.ne.s32.totalorder %s71, %s72
    %p84 = scmp.eq.s32.totalorder %s20, 1
    %p85 = por %p83, %p84
    %p87 = scmp.ne.s32.totalorder %s72, %s86
    %p88 = scmp.eq.s32.totalorder %s20, 0
    %p89 = por %p87, %p88
    %s91 = sadd.s32 %s90, 1
    %p94 = scmp.eq.s32.totalorder %s14, 1
    %p95 = scmp.ne.s32.totalorder %s90, %s92
    %p96 = scmp.eq.s32.totalorder %s14, 0
    %p97 = por %p95, %p96
    %p98 = scmp.ne.s32.totalorder %s90, %s92
    %p99 = scmp.eq.s32.totalorder %s19, 1
    %p100 = por %p98, %p99
    %p101 = scmp.ne.s32.totalorder %s92, %s93
    %p102 = scmp.eq.s32.totalorder %s19, 0
    %p103 = por %p101, %p102
    %p104 = scmp.ne.s32.totalorder %s92, %s93
    %p105 = scmp.eq.s32.totalorder %s20, 1
    %p106 = por %p104, %p105
    %p108 = scmp.ne.s32.totalorder %s93, %s107
    %p109 = scmp.eq.s32.totalorder %s20, 0
    %p110 = por %p108, %p109
    %s112 = sadd.s32 %s111, 1
    %p115 = scmp.eq.s32.totalorder %s14, 1
    %p116 = scmp.ne.s32.totalorder %s111, %s113
    %p117 = scmp.eq.s32.totalorder %s14, 0
    %p118 = por %p116, %p117
    %p119 = scmp.ne.s32.totalorder %s111, %s113
    %p120 = scmp.eq.s32.totalorder %s19, 1
    %p121 = por %p119, %p120
    %p122 = scmp.ne.s32.totalorder %s113, %s114
    %p123 = scmp.eq.s32.totalorder %s19, 0
    %p124 = por %p122, %p123
    %p125 = scmp.ne.s32.totalorder %s113, %s114
    %p126 = scmp.eq.s32.totalorder %s20, 1
    %p127 = por %p125, %p126
    %p129 = scmp.ne.s32.totalorder %s114, %s128
    %p130 = scmp.eq.s32.totalorder %s20, 0
    %p131 = por %p129, %p130
    %s133 = sadd.s32 %s132, 1
    %p136 = scmp.eq.s32.totalorder %s14, 1
    %p137 = scmp.ne.s32.totalorder %s132, %s134
    %p138 = scmp.eq.s32.totalorder %s14, 0
    %p139 = por %p137, %p138
    %p140 = scmp.ne.s32.totalorder %s132, %s134
    %p141 = scmp.eq.s32.totalorder %s19, 1
    %p142 = por %p140, %p141
    %p143 = scmp.ne.s32.totalorder %s134, %s135
    %p144 = scmp.eq.s32.totalorder %s19, 0
    %p145 = por %p143, %p144
    %p146 = scmp.ne.s32.totalorder %s134, %s135
    %p147 = scmp.eq.s32.totalorder %s20, 1
    %p148 = por %p146, %p147
    %p150 = scmp.ne.s32.totalorder %s135, %s149
    %p151 = scmp.eq.s32.totalorder %s20, 0
    %p152 = por %p150, %p151
    %s154 = sadd.s32 %s153, 1
    %p157 = scmp.eq.s32.totalorder %s14, 1
    %p158 = scmp.ne.s32.totalorder %s153, %s155
    %p159 = scmp.eq.s32.totalorder %s14, 0
    %p160 = por %p158, %p159
    %p161 = scmp.ne.s32.totalorder %s153, %s155
    %p162 = scmp.eq.s32.totalorder %s19, 1
    %p163 = por %p161, %p162
    %p164 = scmp.ne.s32.totalorder %s155, %s156
    %p165 = scmp.eq.s32.totalorder %s19, 0
    %p166 = por %p164, %p165
    %p167 = scmp.ne.s32.totalorder %s155, %s156
    %p168 = scmp.eq.s32.totalorder %s20, 1
    %p169 = por %p167, %p168
    %p171 = scmp.ne.s32.totalorder %s156, %s170
    %p172 = scmp.eq.s32.totalorder %s20, 0
    %p173 = por %p171, %p172
    %s175 = sadd.s32 %s174, 1
    %p178 = scmp.eq.s32.totalorder %s14, 1
    %p179 = scmp.ne.s32.totalorder %s174, %s176
    %p180 = scmp.eq.s32.totalorder %s14, 0
    %p181 = por %p179, %p180
    %p182 = scmp.ne.s32.totalorder %s174, %s176
    %p183 = scmp.eq.s32.totalorder %s19, 1
    %p184 = por %p182, %p183
    %p185 = scmp.ne.s32.totalorder %s176, %s177
    %p186 = scmp.eq.s32.totalorder %s19, 0
    %p187 = por %p185, %p186
    %p188 = scmp.ne.s32.totalorder %s176, %s177
    %p189 = scmp.eq.s32.totalorder %s20, 1
    %p190 = por %p188, %p189
    %p192 = scmp.ne.s32.totalorder %s177, %s191
    %p193 = scmp.eq.s32.totalorder %s20, 0
    %p194 = por %p192, %p193
    %s195 = ssub.s32 %s14, %s21
    %p196 = scmp.eq.s32.totalorder %s195, 0
    %s198 = sadd.s32 %s197, 1
    %s199 = scalar_select %p196, %s197, %s198
    %p202 = pneg %p196
    %p203 = scmp.eq.s32.totalorder %s14, 1
    %p204 = por %p202, %p203
    %p205 = scmp.ne.s32.totalorder %s197, %s200
    %p206 = scmp.eq.s32.totalorder %s14, 0
    %p207 = por %p205, %p206
    %p208 = scmp.ne.s32.totalorder %s197, %s200
    %p209 = scmp.eq.s32.totalorder %s19, 1
    %p210 = por %p208, %p209
    %p211 = scmp.ne.s32.totalorder %s200, %s201
    %p212 = scmp.eq.s32.totalorder %s19, 0
    %p213 = por %p211, %p212
    %p214 = scmp.ne.s32.totalorder %s200, %s201
    %p215 = scmp.eq.s32.totalorder %s20, 1
    %p216 = por %p214, %p215
    %p218 = scmp.ne.s32.totalorder %s201, %s217
    %p219 = scmp.eq.s32.totalorder %s20, 0
    %p220 = por %p218, %p219
    %p221 = scmp.le.s32.totalorder 1, %s14
    %p222 = scmp.lt.s32.totalorder %s14, 3
    %p223 = pnand %p221, %p222
    %p224 = pneg %p223
    // Predicated region
    $region9: #{wide_basic_forward.1} parent=5 // pred_check
      _
    $region10: #{wide_basic_forward.1} parent=5 // pred_check_branch
      %226 = sbr.rel (%p223) target = $region12
    $region11: #{wide_basic_forward.1} parent=5 // pred_region
      %s227 = ssub.s32 %s14, 1
      // Predicated region
      $region13: #{wide_basic_forward.1} parent=11 // pred_check
        %p228 = pneg %p61
      $region14: #{wide_basic_forward.1} parent=11 // pred_check_branch
        %230 = sbr.rel (%p228) target = $region16
      $region15: #{wide_basic_forward.1} parent=11 // pred_region
        _
      $region16: #{wide_basic_forward.1} parent=11 // pred_fallthru
        _
      // Predicated region
      $region17: #{wide_basic_forward.1} parent=11 // pred_check
        %p231 = pneg %p82
      $region18: #{wide_basic_forward.1} parent=11 // pred_check_branch
        %233 = sbr.rel (%p231) target = $region20
      $region19: #{wide_basic_forward.1} parent=11 // pred_region
        _
      $region20: #{wide_basic_forward.1} parent=11 // pred_fallthru
        _
      // Predicated region
      $region21: #{wide_basic_forward.1} parent=11 // pred_check
        %p234 = pneg %p103
      $region22: #{wide_basic_forward.1} parent=11 // pred_check_branch
        %236 = sbr.rel (%p234) target = $region24
      $region23: #{wide_basic_forward.1} parent=11 // pred_region
        _
      $region24: #{wide_basic_forward.1} parent=11 // pred_fallthru
        _
      // Predicated region
      $region25: #{wide_basic_forward.1} parent=11 // pred_check
        %p237 = pneg %p124
      $region26: #{wide_basic_forward.1} parent=11 // pred_check_branch
        %239 = sbr.rel (%p237) target = $region28
      $region27: #{wide_basic_forward.1} parent=11 // pred_region
        _
      $region28: #{wide_basic_forward.1} parent=11 // pred_fallthru
        _
      // Predicated region
      $region29: #{wide_basic_forward.1} parent=11 // pred_check
        %p240 = pneg %p145
      $region30: #{wide_basic_forward.1} parent=11 // pred_check_branch
        %242 = sbr.rel (%p240) target = $region32
      $region31: #{wide_basic_forward.1} parent=11 // pred_region
        _
      $region32: #{wide_basic_forward.1} parent=11 // pred_fallthru
        _
      // Predicated region
      $region33: #{wide_basic_forward.1} parent=11 // pred_check
        %p243 = pneg %p166
      $region34: #{wide_basic_forward.1} parent=11 // pred_check_branch
        %245 = sbr.rel (%p243) target = $region36
      $region35: #{wide_basic_forward.1} parent=11 // pred_region
        _
      $region36: #{wide_basic_forward.1} parent=11 // pred_fallthru
        _
      // Predicated region
      $region37: #{wide_basic_forward.1} parent=11 // pred_check
        %p246 = pneg %p187
      $region38: #{wide_basic_forward.1} parent=11 // pred_check_branch
        %248 = sbr.rel (%p246) target = $region40
      $region39: #{wide_basic_forward.1} parent=11 // pred_region
        _
      $region40: #{wide_basic_forward.1} parent=11 // pred_fallthru
        _
    $region12: #{wide_basic_forward.1} parent=5 // pred_fallthru
      _
    %p249 = scmp.lt.s32.totalorder %s14, 2
    // Predicated region
    $region41: #{wide_basic_forward.1} parent=5 // pred_check
      %p250 = pneg %p249
    $region42: #{wide_basic_forward.1} parent=5 // pred_check_branch
      %252 = sbr.rel (%p250) target = $region44
    $region43: #{wide_basic_forward.1} parent=5 // pred_region
      // Predicated region
      $region45: #{wide_basic_forward.1} parent=43 // pred_check
        %p253 = pneg %p34
      $region46: #{wide_basic_forward.1} parent=43 // pred_check_branch
        %255 = sbr.rel (%p253) target = $region48
      $region47: #{wide_basic_forward.1} parent=43 // pred_region
        %p256 = scmp.lt.s32.totalorder %s14, 1
        %s257 = scalar_select %p256, %s14, 1
        %s258 = smul.addr %s257, 2
        %s259 = smul.addr %s258, 8
        %s260 = scalar_lea.vmem %s0, %s259
      $region48: #{wide_basic_forward.1} parent=43 // pred_fallthru
        _
    $region44: #{wide_basic_forward.1} parent=5 // pred_fallthru
      _
    %p261 = scmp.le.s32.totalorder 1, %s14
    %p262 = scmp.lt.s32.totalorder %s14, 3
    %p263 = pnand %p261, %p262
    %p264 = pneg %p263
    // Predicated region
    $region49: #{wide_basic_forward.1} parent=5 // pred_check
      _
    $region50: #{wide_basic_forward.1} parent=5 // pred_check_branch
      %266 = sbr.rel (%p263) target = $region52
    $region51: #{wide_basic_forward.1} parent=5 // pred_region
      %s267 = ssub.s32 %s14, 1
      %p268 = scmp.lt.s32.totalorder %s19, 1
      %s269 = scalar_select %p268, %s19, 1
      %s270 = smul.addr %s269, 2
      %s271 = smul.addr %s270, 8
      %s272 = scalar_lea.vmem %s0, %s271
      %p273 = pneg %p40
      %p274 = pneg %p37
      %p275 = pneg %p61
      %p276 = pneg %p58
      %p277 = pneg %p82
      %p278 = pneg %p79
      %p279 = pneg %p103
      %p280 = pneg %p100
      %p281 = pneg %p124
      %p282 = pneg %p121
      %p283 = pneg %p145
      %p284 = pneg %p142
      %p285 = pneg %p166
      %p286 = pneg %p163
      %p287 = pneg %p187
      %p288 = pneg %p184
      %p289 = pneg %p213
      %p290 = pneg %p210
      %p291 = scmp.lt.s32.totalorder %s19, 1
      %s292 = scalar_select %p291, %s19, 1
      %s293 = smul.addr %s292, 2
      %s294 = smul.addr %s293, 8
      %s295 = scalar_lea.vmem %s8, %s294
      %p296 = scmp.lt.s32.totalorder %s19, 1
      %s297 = scalar_select %p296, %s19, 1
      %s298 = smul.addr %s297, 2
      %s299 = smul.addr %s298, 8
      %s300 = scalar_lea.vmem %s0, %s299
      %p301 = scmp.lt.s32.totalorder %s19, 1
      %s302 = scalar_select %p301, %s19, 1
      %s303 = smul.addr %s302, 2
      %s304 = smul.addr %s303, 8
      %s305 = scalar_lea.vmem %s8, %s304
      %vm306 = vcmask 516096
      %307 = vst.msk [vmem:[#allocation2] sm:$0x1] %vm306, 0.0
      %308 = vst.msk [vmem:[#allocation2 + $0x11] sm:$0x1] %vm306, 0.0
      %v309 = vlaneseq
      %vm310 = vcmp.ge.s32.totalorder %v309, 0
      %vm311 = vcmp.lt.s32.totalorder %v309, 256
      %vm312 = vmand %vm310, %vm311
      %313 = vst.msk [vmem:[#allocation3] ss:$8 sm:$0x3] %vm312, 0.0
      %314 = vst.msk [vmem:[#allocation3] ss:$8 sm:$0x0] %vm312, 0.0
      %s315 = scalar_lea.vmem [#allocation3], 33
      %316 = vst.msk [vmem:[%s315] ss:$8 sm:$0x3] %vm312, 0.0
      %317 = vst.msk [vmem:[%s315] ss:$8 sm:$0x0] %vm312, 0.0
      %v318 = vld [vmem:[%s300] sm:$0xff]
      %v319 = vld [vmem:[%s300 + $0x8] sm:$0xff]
      %v320 = vld [vmem:[%s1] sm:$0x1]
      %v322 = vlaneseq
      %v323 = vshrl.u32 %v322, 7
      %v324 = vsub.s32 0, %v323
      %v325 = vrot.slane %v320, %v324
      %v327 = vmul.f32 %v318, %v325
      %v328 = vmul.f32 %v319, %v325
      %v329 = vld [vmem:[%s2] sm:$0x1]
      %v331 = vlaneseq
      %v332 = vshrl.u32 %v331, 7
      %v333 = vsub.s32 0, %v332
      %v334 = vrot.slane %v329, %v333
      %v336 = vadd.f32 %v327, %v334
      %v337 = vadd.f32 %v328, %v334
      %v338 = vmax.f32 %v336, 0.0
      %v339 = vmax.f32 %v337, 0.0
      %vm340 = vcmask 523264
      %341 = vst.msk [vmem:[#allocation2 + $0x1] sm:$0xff] %vm340, %v338
      %342 = vst.msk [vmem:[#allocation2 + $0x9] sm:$0xff] %vm340, %v339
      %v343 = vld [vmem:[#allocation2] sm:$0xff]
      %v344 = vld [vmem:[#allocation2 + $0x8] sm:$0xff]
      %v345 = vld [vmem:[%s3] sm:$0xff]
      %v346 = vld [vmem:[%s3 + $0x8] sm:$0xff]
      %v347 = vld [vmem:[%s3 + $0x10] sm:$0xff]
      %v348 = vld [vmem:[%s3 + $0x18] sm:$0xff]
      %v349 = vld [vmem:[%s3 + $0x20] sm:$0xff]
      %v350 = vld [vmem:[%s3 + $0x28] sm:$0xff]
      %v351 = vld [vmem:[%s3 + $0x30] sm:$0xff]
      %v352 = vld [vmem:[%s3 + $0x38] sm:$0xff]
      %v353 = vld [vmem:[%s3 + $0x40] sm:$0xff]
      %v354 = vld [vmem:[%s3 + $0x48] sm:$0xff]
      %v355 = vld [vmem:[%s3 + $0x50] sm:$0xff]
      %v356 = vld [vmem:[%s3 + $0x58] sm:$0xff]
      %v357 = vld [vmem:[%s3 + $0x60] sm:$0xff]
      %v358 = vld [vmem:[%s3 + $0x68] sm:$0xff]
      %v359 = vld [vmem:[%s3 + $0x70] sm:$0xff]
      %v360 = vld [vmem:[%s3 + $0x78] sm:$0xff]
      %v361 = vld [vmem:[#allocation2 + $0x1] sm:$0xff]
      %v362 = vld [vmem:[#allocation2 + $0x9] sm:$0xff]
      %s363 = scalar_lea.vmem %s3, 128
      %v364 = vld [vmem:[%s363] sm:$0xff]
      %v365 = vld [vmem:[%s363 + $0x8] sm:$0xff]
      %v366 = vld [vmem:[%s363 + $0x10] sm:$0xff]
      %v367 = vld [vmem:[%s363 + $0x18] sm:$0xff]
      %v368 = vld [vmem:[%s363 + $0x20] sm:$0xff]
      %v369 = vld [vmem:[%s363 + $0x28] sm:$0xff]
      %v370 = vld [vmem:[%s363 + $0x30] sm:$0xff]
      %v371 = vld [vmem:[%s363 + $0x38] sm:$0xff]
      %v372 = vld [vmem:[%s363 + $0x40] sm:$0xff]
      %v373 = vld [vmem:[%s363 + $0x48] sm:$0xff]
      %v374 = vld [vmem:[%s363 + $0x50] sm:$0xff]
      %v375 = vld [vmem:[%s363 + $0x58] sm:$0xff]
      %v376 = vld [vmem:[%s363 + $0x60] sm:$0xff]
      %v377 = vld [vmem:[%s363 + $0x68] sm:$0xff]
      %v378 = vld [vmem:[%s363 + $0x70] sm:$0xff]
      %v379 = vld [vmem:[%s363 + $0x78] sm:$0xff]
      %v381 = vsel %vm340, %v361, 0
      %v384 = vsel %vm340, %v362, 0
      %386 = vmatprep.subr.mxu0 %v365
      %387 = vmatpush1.msra.mxu0 %v364
      %388 = vmatprep.subr.mxu0 %v367
      %389 = vmatpush1.msra.mxu0 %v366
      %390 = vmatprep.subr.mxu0 %v369
      %391 = vmatpush1.msra.mxu0 %v368
      %392 = vmatprep.subr.mxu0 %v371
      %393 = vmatpush1.msra.mxu0 %v370
      %394 = vmatprep.subr.mxu0 %v373
      %395 = vmatpush1.msra.mxu0 %v372
      %396 = vmatprep.subr.mxu0 %v375
      %397 = vmatpush1.msra.mxu0 %v374
      %398 = vmatprep.subr.mxu0 %v377
      %399 = vmatpush1.msra.mxu0 %v376
      %400 = vmatprep.subr.mxu0 %v379
      %401 = vmatpush1.msra.mxu0 %v378
      %402 = vmatprep.subr.mxu0 0.0
      %403 = vmatpush1.msra.mxu0 0.0
      %404 = vmatprep.subr.mxu0 0.0
      %405 = vmatpush1.msra.mxu0 0.0
      %406 = vmatprep.subr.mxu0 0.0
      %407 = vmatpush1.msra.mxu0 0.0
      %408 = vmatprep.subr.mxu0 0.0
      %409 = vmatpush1.msra.mxu0 0.0
      %410 = vmatprep.subr.mxu0 0.0
      %411 = vmatpush1.msra.mxu0 0.0
      %412 = vmatprep.subr.mxu0 0.0
      %413 = vmatpush1.msra.mxu0 0.0
      %414 = vmatprep.subr.mxu0 0.0
      %415 = vmatpush1.msra.mxu0 0.0
      %416 = vmatprep.subr.mxu0 0.0
      %417 = vmatpush1.msra.mxu0 0.0
      %418 = vmatprep.subr.mxu0 0.0
      %419 = vmatpush1.msra.mxu0 0.0
      %420 = vmatprep.subr.mxu0 0.0
      %421 = vmatpush1.msra.mxu0 0.0
      %422 = vmatprep.subr.mxu0 0.0
      %423 = vmatpush1.msra.mxu0 0.0
      %424 = vmatprep.subr.mxu0 0.0
      %425 = vmatpush1.msra.mxu0 0.0
      %426 = vmatprep.subr.mxu0 0.0
      %427 = vmatpush1.msra.mxu0 0.0
      %428 = vmatprep.subr.mxu0 0.0
      %429 = vmatpush1.msra.mxu0 0.0
      %430 = vmatprep.subr.mxu0 0.0
      %431 = vmatpush1.msra.mxu0 0.0
      %432 = vmatprep.subr.mxu0 0.0
      %433 = vmatpush1.msra.mxu0 0.0
      %434 = vmatprep.subr.mxu0 0.0
      %435 = vmatpush1.msra.mxu0 0.0
      %436 = vmatprep.subr.mxu0 0.0
      %437 = vmatpush1.msra.mxu0 0.0
      %438 = vmatprep.subr.mxu0 0.0
      %439 = vmatpush1.msra.mxu0 0.0
      %440 = vmatprep.subr.mxu0 0.0
      %441 = vmatpush1.msra.mxu0 0.0
      %442 = vmatprep.subr.mxu0 0.0
      %443 = vmatpush1.msra.mxu0 0.0
      %444 = vmatprep.subr.mxu0 0.0
      %445 = vmatpush1.msra.mxu0 0.0
      %446 = vmatprep.subr.mxu0 0.0
      %447 = vmatpush1.msra.mxu0 0.0
      %448 = vmatprep.subr.mxu0 0.0
      %449 = vmatpush1.msra.mxu0 0.0
      %450 = vmatprep.mubr.f32.mxu0 0.0
      %451 = vmatmul.mubr.f32.gmra.mrb[0].mxu0 %v381
      %v452 = vpop.f32.mrb[0].mxu0
      %v453 = vadd.f32 0.0, %v452
      %v454 = vpop.f32.mrb[0].mxu0
      %v455 = vadd.f32 0.0, %v454
      %456 = vmatprep.mubr.f32.mxu0 0.0
      %457 = vmatmul.mubr.f32.gmra.mrb[0].mxu0 %v384
      %v458 = vpop.f32.mrb[0].mxu0
      %v459 = vadd.f32 0.0, %v458
      %v460 = vpop.f32.mrb[0].mxu0
      %v461 = vadd.f32 0.0, %v460
      %462 = vdwg.mxu0
      %v464 = vsel %vm340, %v343, 0
      %v467 = vsel %vm340, %v344, 0
      %469 = vmatprep.subr.mxu0 %v346
      %470 = vmatpush1.msra.mxu0 %v345
      %471 = vmatprep.subr.mxu0 %v348
      %472 = vmatpush1.msra.mxu0 %v347
      %473 = vmatprep.subr.mxu0 %v350
      %474 = vmatpush1.msra.mxu0 %v349
      %475 = vmatprep.subr.mxu0 %v352
      %476 = vmatpush1.msra.mxu0 %v351
      %477 = vmatprep.subr.mxu0 %v354
      %478 = vmatpush1.msra.mxu0 %v353
      %479 = vmatprep.subr.mxu0 %v356
      %480 = vmatpush1.msra.mxu0 %v355
      %481 = vmatprep.subr.mxu0 %v358
      %482 = vmatpush1.msra.mxu0 %v357
      %483 = vmatprep.subr.mxu0 %v360
      %484 = vmatpush1.msra.mxu0 %v359
      %485 = vmatprep.subr.mxu0 0.0
      %486 = vmatpush1.msra.mxu0 0.0
      %487 = vmatprep.subr.mxu0 0.0
      %488 = vmatpush1.msra.mxu0 0.0
      %489 = vmatprep.subr.mxu0 0.0
      %490 = vmatpush1.msra.mxu0 0.0
      %491 = vmatprep.subr.mxu0 0.0
      %492 = vmatpush1.msra.mxu0 0.0
      %493 = vmatprep.subr.mxu0 0.0
      %494 = vmatpush1.msra.mxu0 0.0
      %495 = vmatprep.subr.mxu0 0.0
      %496 = vmatpush1.msra.mxu0 0.0
      %497 = vmatprep.subr.mxu0 0.0
      %498 = vmatpush1.msra.mxu0 0.0
      %499 = vmatprep.subr.mxu0 0.0
      %500 = vmatpush1.msra.mxu0 0.0
      %501 = vmatprep.subr.mxu0 0.0
      %502 = vmatpush1.msra.mxu0 0.0
      %503 = vmatprep.subr.mxu0 0.0
      %504 = vmatpush1.msra.mxu0 0.0
      %505 = vmatprep.subr.mxu0 0.0
      %506 = vmatpush1.msra.mxu0 0.0
      %507 = vmatprep.subr.mxu0 0.0
      %508 = vmatpush1.msra.mxu0 0.0
      %509 = vmatprep.subr.mxu0 0.0
      %510 = vmatpush1.msra.mxu0 0.0
      %511 = vmatprep.subr.mxu0 0.0
      %512 = vmatpush1.msra.mxu0 0.0
      %513 = vmatprep.subr.mxu0 0.0
      %514 = vmatpush1.msra.mxu0 0.0
      %515 = vmatprep.subr.mxu0 0.0
      %516 = vmatpush1.msra.mxu0 0.0
      %517 = vmatprep.subr.mxu0 0.0
      %518 = vmatpush1.msra.mxu0 0.0
      %519 = vmatprep.subr.mxu0 0.0
      %520 = vmatpush1.msra.mxu0 0.0
      %521 = vmatprep.subr.mxu0 0.0
      %522 = vmatpush1.msra.mxu0 0.0
      %523 = vmatprep.subr.mxu0 0.0
      %524 = vmatpush1.msra.mxu0 0.0
      %525 = vmatprep.subr.mxu0 0.0
      %526 = vmatpush1.msra.mxu0 0.0
      %527 = vmatprep.subr.mxu0 0.0
      %528 = vmatpush1.msra.mxu0 0.0
      %529 = vmatprep.subr.mxu0 0.0
      %530 = vmatpush1.msra.mxu0 0.0
      %531 = vmatprep.subr.mxu0 0.0
      %532 = vmatpush1.msra.mxu0 0.0
      %533 = vmatprep.mubr.f32.mxu0 0.0
      %534 = vmatmul.mubr.f32.gmra.mrb[0].mxu0 %v464
      %v535 = vpop.f32.mrb[0].mxu0
      %v536 = vadd.f32 %v453, %v535
      %v537 = vpop.f32.mrb[0].mxu0
      %v538 = vadd.f32 %v455, %v537
      %539 = vmatprep.mubr.f32.mxu0 0.0
      %540 = vmatmul.mubr.f32.gmra.mrb[0].mxu0 %v467
      %v541 = vpop.f32.mrb[0].mxu0
      %v542 = vadd.f32 %v459, %v541
      %v543 = vpop.f32.mrb[0].mxu0
      %v544 = vadd.f32 %v461, %v543
      %545 = vdwg.mxu0
      %v546 = vld [vmem:[#allocation2 + $0x2] sm:$0xff]
      %v547 = vld [vmem:[#allocation2 + $0xa] sm:$0xff]
      %s548 = scalar_lea.vmem %s3, 256
      %v549 = vld [vmem:[%s548] sm:$0xff]
      %v550 = vld [vmem:[%s548 + $0x8] sm:$0xff]
      %v551 = vld [vmem:[%s548 + $0x10] sm:$0xff]
      %v552 = vld [vmem:[%s548 + $0x18] sm:$0xff]
      %v553 = vld [vmem:[%s548 + $0x20] sm:$0xff]
      %v554 = vld [vmem:[%s548 + $0x28] sm:$0xff]
      %v555 = vld [vmem:[%s548 + $0x30] sm:$0xff]
      %v556 = vld [vmem:[%s548 + $0x38] sm:$0xff]
      %v557 = vld [vmem:[%s548 + $0x40] sm:$0xff]
      %v558 = vld [vmem:[%s548 + $0x48] sm:$0xff]
      %v559 = vld [vmem:[%s548 + $0x50] sm:$0xff]
      %v560 = vld [vmem:[%s548 + $0x58] sm:$0xff]
      %v561 = vld [vmem:[%s548 + $0x60] sm:$0xff]
      %v562 = vld [vmem:[%s548 + $0x68] sm:$0xff]
      %v563 = vld [vmem:[%s548 + $0x70] sm:$0xff]
      %v564 = vld [vmem:[%s548 + $0x78] sm:$0xff]
      %v566 = vsel %vm340, %v546, 0
      %v569 = vsel %vm340, %v547, 0
      %571 = vmatprep.subr.mxu0 %v550
      %572 = vmatpush1.msra.mxu0 %v549
      %573 = vmatprep.subr.mxu0 %v552
      %574 = vmatpush1.msra.mxu0 %v551
      %575 = vmatprep.subr.mxu0 %v554
      %576 = vmatpush1.msra.mxu0 %v553
      %577 = vmatprep.subr.mxu0 %v556
      %578 = vmatpush1.msra.mxu0 %v555
      %579 = vmatprep.subr.mxu0 %v558
      %580 = vmatpush1.msra.mxu0 %v557
      %581 = vmatprep.subr.mxu0 %v560
      %582 = vmatpush1.msra.mxu0 %v559
      %583 = vmatprep.subr.mxu0 %v562
      %584 = vmatpush1.msra.mxu0 %v561
      %585 = vmatprep.subr.mxu0 %v564
      %586 = vmatpush1.msra.mxu0 %v563
      %587 = vmatprep.subr.mxu0 0.0
      %588 = vmatpush1.msra.mxu0 0.0
      %589 = vmatprep.subr.mxu0 0.0
      %590 = vmatpush1.msra.mxu0 0.0
      %591 = vmatprep.subr.mxu0 0.0
      %592 = vmatpush1.msra.mxu0 0.0
      %593 = vmatprep.subr.mxu0 0.0
      %594 = vmatpush1.msra.mxu0 0.0
      %595 = vmatprep.subr.mxu0 0.0
      %596 = vmatpush1.msra.mxu0 0.0
      %597 = vmatprep.subr.mxu0 0.0
      %598 = vmatpush1.msra.mxu0 0.0
      %599 = vmatprep.subr.mxu0 0.0
      %600 = vmatpush1.msra.mxu0 0.0
      %601 = vmatprep.subr.mxu0 0.0
      %602 = vmatpush1.msra.mxu0 0.0
      %603 = vmatprep.subr.mxu0 0.0
      %604 = vmatpush1.msra.mxu0 0.0
      %605 = vmatprep.subr.mxu0 0.0
      %606 = vmatpush1.msra.mxu0 0.0
      %607 = vmatprep.subr.mxu0 0.0
      %608 = vmatpush1.msra.mxu0 0.0
      %609 = vmatprep.subr.mxu0 0.0
      %610 = vmatpush1.msra.mxu0 0.0
      %611 = vmatprep.subr.mxu0 0.0
      %612 = vmatpush1.msra.mxu0 0.0
      %613 = vmatprep.subr.mxu0 0.0
      %614 = vmatpush1.msra.mxu0 0.0
      %615 = vmatprep.subr.mxu0 0.0
      %616 = vmatpush1.msra.mxu0 0.0
      %617 = vmatprep.subr.mxu0 0.0
      %618 = vmatpush1.msra.mxu0 0.0
      %619 = vmatprep.subr.mxu0 0.0
      %620 = vmatpush1.msra.mxu0 0.0
      %621 = vmatprep.subr.mxu0 0.0
      %622 = vmatpush1.msra.mxu0 0.0
      %623 = vmatprep.subr.mxu0 0.0
      %624 = vmatpush1.msra.mxu0 0.0
      %625 = vmatprep.subr.mxu0 0.0
      %626 = vmatpush1.msra.mxu0 0.0
      %627 = vmatprep.subr.mxu0 0.0
      %628 = vmatpush1.msra.mxu0 0.0
      %629 = vmatprep.subr.mxu0 0.0
      %630 = vmatpush1.msra.mxu0 0.0
      %631 = vmatprep.subr.mxu0 0.0
      %632 = vmatpush1.msra.mxu0 0.0
      %633 = vmatprep.subr.mxu0 0.0
      %634 = vmatpush1.msra.mxu0 0.0
      %635 = vmatprep.mubr.f32.mxu0 0.0
      %636 = vmatmul.mubr.f32.gmra.mrb[0].mxu0 %v566
      %v637 = vpop.f32.mrb[0].mxu0
      %v638 = vadd.f32 0.0, %v637
      %v639 = vpop.f32.mrb[0].mxu0
      %v640 = vadd.f32 0.0, %v639
      %641 = vmatprep.mubr.f32.mxu0 0.0
      %642 = vmatmul.mubr.f32.gmra.mrb[0].mxu0 %v569
      %v643 = vpop.f32.mrb[0].mxu0
      %v644 = vadd.f32 0.0, %v643
      %v645 = vpop.f32.mrb[0].mxu0
      %v646 = vadd.f32 0.0, %v645
      %647 = vdwg.mxu0
      %v648 = vadd.f32 %v536, %v638
      %v649 = vadd.f32 %v538, %v640
      %v650 = vadd.f32 %v542, %v644
      %v651 = vadd.f32 %v544, %v646
      %v652 = vld [vmem:[%s4] sm:$0x3]
      %v654 = vlaneseq
      %v655 = vshrl.u32 %v654, 7
      %v656 = vsub.s32 0, %v655
      %v657 = vrot.slane %v652, %v656
      %v658 = vlaneseq
      %v659 = vshrl.u32 %v658, 7
      %v660 = vsub.s32 1, %v659
      %v661 = vrot.slane %v652, %v660
      %v664 = vmul.f32 %v648, %v657
      %v665 = vmul.f32 %v649, %v661
      %v666 = vmul.f32 %v650, %v657
      %v667 = vmul.f32 %v651, %v661
      %v668 = vld [vmem:[%s5] sm:$0x3]
      %v670 = vlaneseq
      %v671 = vshrl.u32 %v670, 7
      %v672 = vsub.s32 0, %v671
      %v673 = vrot.slane %v668, %v672
      %v674 = vlaneseq
      %v675 = vshrl.u32 %v674, 7
      %v676 = vsub.s32 1, %v675
      %v677 = vrot.slane %v668, %v676
      %v680 = vadd.f32 %v664, %v673
      %v681 = vadd.f32 %v665, %v677
      %v682 = vadd.f32 %v666, %v673
      %v683 = vadd.f32 %v667, %v677
      %v684 = vmax.f32 %v680, 0.0
      %v685 = vmax.f32 %v681, 0.0
      %v686 = vmax.f32 %v682, 0.0
      %v687 = vmax.f32 %v683, 0.0
      %vm692 = vcmask 1040384
      %v693 = vrot.slane %v684, 7
      %v694 = vrot.slane %v685, 7
      %v695 = vrot.slane %v686, 7
      %v696 = vsel %vm692, %v693, %v695
      %v697 = vrot.slane %v687, 7
      %v698 = vsel %vm692, %v694, %v697
      %705 = vst [vmem:[#allocation3] sm:$0xfe] %v693
      %706 = vst [vmem:[#allocation3 + $0x8] sm:$0xfe] %v694
      %707 = vst [vmem:[#allocation3 + $0x10] sm:$0xff] %v696
      %708 = vst [vmem:[#allocation3 + $0x18] sm:$0xff] %v698
      %709 = vst [vmem:[#allocation3 + $0x20] sm:$0x1] %v695
      %710 = vst [vmem:[#allocation3 + $0x28] sm:$0x1] %v697
      %v711 = vld [vmem:[#allocation3] sm:$0xff]
      %v712 = vld [vmem:[#allocation3 + $0x8] sm:$0xff]
      %v713 = vld [vmem:[#allocation3 + $0x10] sm:$0xff]
      %v714 = vld [vmem:[#allocation3 + $0x18] sm:$0xff]
      %v715 = vld [vmem:[%s6] sm:$0xff]
      %v716 = vld [vmem:[%s6 + $0x8] sm:$0xff]
      %v717 = vld [vmem:[%s6 + $0x10] sm:$0xff]
      %v718 = vld [vmem:[%s6 + $0x18] sm:$0xff]
      %v719 = vld [vmem:[%s6 + $0x20] sm:$0xff]
      %v720 = vld [vmem:[%s6 + $0x28] sm:$0xff]
      %v721 = vld [vmem:[%s6 + $0x30] sm:$0xff]
      %v722 = vld [vmem:[%s6 + $0x38] sm:$0xff]
      %v723 = vld [vmem:[%s6 + $0x40] sm:$0xff]
      %v724 = vld [vmem:[%s6 + $0x48] sm:$0xff]
      %v725 = vld [vmem:[%s6 + $0x50] sm:$0xff]
      %v726 = vld [vmem:[%s6 + $0x58] sm:$0xff]
      %v727 = vld [vmem:[%s6 + $0x60] sm:$0xff]
      %v728 = vld [vmem:[%s6 + $0x68] sm:$0xff]
      %v729 = vld [vmem:[%s6 + $0x70] sm:$0xff]
      %v730 = vld [vmem:[%s6 + $0x78] sm:$0xff]
      %v731 = vld [vmem:[%s6 + $0x80] sm:$0xff]
      %v732 = vld [vmem:[%s6 + $0x88] sm:$0xff]
      %v733 = vld [vmem:[%s6 + $0x90] sm:$0xff]
      %v734 = vld [vmem:[%s6 + $0x98] sm:$0xff]
      %v735 = vld [vmem:[%s6 + $0xa0] sm:$0xff]
      %v736 = vld [vmem:[%s6 + $0xa8] sm:$0xff]
      %v737 = vld [vmem:[%s6 + $0xb0] sm:$0xff]
      %v738 = vld [vmem:[%s6 + $0xb8] sm:$0xff]
      %v739 = vld [vmem:[%s6 + $0xc0] sm:$0xff]
      %v740 = vld [vmem:[%s6 + $0xc8] sm:$0xff]
      %v741 = vld [vmem:[%s6 + $0xd0] sm:$0xff]
      %v742 = vld [vmem:[%s6 + $0xd8] sm:$0xff]
      %v743 = vld [vmem:[%s6 + $0xe0] sm:$0xff]
      %v744 = vld [vmem:[%s6 + $0xe8] sm:$0xff]
      %v745 = vld [vmem:[%s6 + $0xf0] sm:$0xff]
      %v746 = vld [vmem:[%s6 + $0xf8] sm:$0xff]
      %v747 = vld [vmem:[#allocation3] sm:$0xfe]
      %v748 = vld [vmem:[#allocation3 + $0x8] sm:$0xfe]
      %v749 = vld [vmem:[#allocation3 + $0x20] sm:$0x1]
      %v750 = vld [vmem:[#allocation3 + $0x28] sm:$0x1]
      %s751 = scalar_lea.vmem %s6, 256
      %v752 = vld [vmem:[%s751] sm:$0xff]
      %v753 = vld [vmem:[%s751 + $0x8] sm:$0xff]
      %v754 = vld [vmem:[%s751 + $0x10] sm:$0xff]
      %v755 = vld [vmem:[%s751 + $0x18] sm:$0xff]
      %v756 = vld [vmem:[%s751 + $0x20] sm:$0xff]
      %v757 = vld [vmem:[%s751 + $0x28] sm:$0xff]
      %v758 = vld [vmem:[%s751 + $0x30] sm:$0xff]
      %v759 = vld [vmem:[%s751 + $0x38] sm:$0xff]
      %v760 = vld [vmem:[%s751 + $0x40] sm:$0xff]
      %v761 = vld [vmem:[%s751 + $0x48] sm:$0xff]
      %v762 = vld [vmem:[%s751 + $0x50] sm:$0xff]
      %v763 = vld [vmem:[%s751 + $0x58] sm:$0xff]
      %v764 = vld [vmem:[%s751 + $0x60] sm:$0xff]
      %v765 = vld [vmem:[%s751 + $0x68] sm:$0xff]
      %v766 = vld [vmem:[%s751 + $0x70] sm:$0xff]
      %v767 = vld [vmem:[%s751 + $0x78] sm:$0xff]
      %v768 = vld [vmem:[%s751 + $0x80] sm:$0xff]
      %v769 = vld [vmem:[%s751 + $0x88] sm:$0xff]
      %v770 = vld [vmem:[%s751 + $0x90] sm:$0xff]
      %v771 = vld [vmem:[%s751 + $0x98] sm:$0xff]
      %v772 = vld [vmem:[%s751 + $0xa0] sm:$0xff]
      %v773 = vld [vmem:[%s751 + $0xa8] sm:$0xff]
      %v774 = vld [vmem:[%s751 + $0xb0] sm:$0xff]
      %v775 = vld [vmem:[%s751 + $0xb8] sm:$0xff]
      %v776 = vld [vmem:[%s751 + $0xc0] sm:$0xff]
      %v777 = vld [vmem:[%s751 + $0xc8] sm:$0xff]
      %v778 = vld [vmem:[%s751 + $0xd0] sm:$0xff]
      %v779 = vld [vmem:[%s751 + $0xd8] sm:$0xff]
      %v780 = vld [vmem:[%s751 + $0xe0] sm:$0xff]
      %v781 = vld [vmem:[%s751 + $0xe8] sm:$0xff]
      %v782 = vld [vmem:[%s751 + $0xf0] sm:$0xff]
      %v783 = vld [vmem:[%s751 + $0xf8] sm:$0xff]
      %vm790 = vcmask 1046528
      %v791 = vrot.slane %v747, 1
      %v792 = vrot.slane %v713, 1
      %v793 = vsel %vm790, %v791, %v792
      %v794 = vrot.slane %v748, 1
      %v795 = vrot.slane %v714, 1
      %v796 = vsel %vm790, %v794, %v795
      %v797 = vrot.slane %v749, 1
      %v798 = vsel %vm790, %v792, %v797
      %v799 = vrot.slane %v750, 1
      %v800 = vsel %vm790, %v795, %v799
      %805 = vmatprep.subr.mxu0 0.0
      %806 = vmatpush1.msra.mxu0 %v752
      %807 = vmatprep.subr.mxu0 0.0
      %808 = vmatpush1.msra.mxu0 %v753
      %809 = vmatprep.subr.mxu0 0.0
      %810 = vmatpush1.msra.mxu0 %v754
      %811 = vmatprep.subr.mxu0 0.0
      %812 = vmatpush1.msra.mxu0 %v755
      %813 = vmatprep.subr.mxu0 0.0
      %814 = vmatpush1.msra.mxu0 %v756
      %815 = vmatprep.subr.mxu0 0.0
      %816 = vmatpush1.msra.mxu0 %v757
      %817 = vmatprep.subr.mxu0 0.0
      %818 = vmatpush1.msra.mxu0 %v758
      %819 = vmatprep.subr.mxu0 0.0
      %820 = vmatpush1.msra.mxu0 %v759
      %821 = vmatprep.subr.mxu0 0.0
      %822 = vmatpush1.msra.mxu0 %v760
      %823 = vmatprep.subr.mxu0 0.0
      %824 = vmatpush1.msra.mxu0 %v761
      %825 = vmatprep.subr.mxu0 0.0
      %826 = vmatpush1.msra.mxu0 %v762
      %827 = vmatprep.subr.mxu0 0.0
      %828 = vmatpush1.msra.mxu0 %v763
      %829 = vmatprep.subr.mxu0 0.0
      %830 = vmatpush1.msra.mxu0 %v764
      %831 = vmatprep.subr.mxu0 0.0
      %832 = vmatpush1.msra.mxu0 %v765
      %833 = vmatprep.subr.mxu0 0.0
      %834 = vmatpush1.msra.mxu0 %v766
      %835 = vmatprep.subr.mxu0 0.0
      %836 = vmatpush1.msra.mxu0 %v767
      %837 = vmatprep.subr.mxu0 0.0
      %838 = vmatpush1.msra.mxu0 %v768
      %839 = vmatprep.subr.mxu0 0.0
      %840 = vmatpush1.msra.mxu0 %v769
      %841 = vmatprep.subr.mxu0 0.0
      %842 = vmatpush1.msra.mxu0 %v770
      %843 = vmatprep.subr.mxu0 0.0
      %844 = vmatpush1.msra.mxu0 %v771
      %845 = vmatprep.subr.mxu0 0.0
      %846 = vmatpush1.msra.mxu0 %v772
      %847 = vmatprep.subr.mxu0 0.0
      %848 = vmatpush1.msra.mxu0 %v773
      %849 = vmatprep.subr.mxu0 0.0
      %850 = vmatpush1.msra.mxu0 %v774
      %851 = vmatprep.subr.mxu0 0.0
      %852 = vmatpush1.msra.mxu0 %v775
      %853 = vmatprep.subr.mxu0 0.0
      %854 = vmatpush1.msra.mxu0 %v776
      %855 = vmatprep.subr.mxu0 0.0
      %856 = vmatpush1.msra.mxu0 %v777
      %857 = vmatprep.subr.mxu0 0.0
      %858 = vmatpush1.msra.mxu0 %v778
      %859 = vmatprep.subr.mxu0 0.0
      %860 = vmatpush1.msra.mxu0 %v779
      %861 = vmatprep.subr.mxu0 0.0
      %862 = vmatpush1.msra.mxu0 %v780
      %863 = vmatprep.subr.mxu0 0.0
      %864 = vmatpush1.msra.mxu0 %v781
      %865 = vmatprep.subr.mxu0 0.0
      %866 = vmatpush1.msra.mxu0 %v782
      %867 = vmatprep.subr.mxu0 0.0
      %868 = vmatpush1.msra.mxu0 %v783
      %869 = vmatprep.mubr.f32.mxu0 %v796
      %870 = vmatmul.mubr.f32.gmra.mrb[0].mxu0 %v793
      %v871 = vpop.f32.mrb[0].mxu0
      %v872 = vadd.f32 0.0, %v871
      %v873 = vpop.f32.mrb[0].mxu0
      %874 = vmatprep.mubr.f32.mxu0 %v800
      %875 = vmatmul.mubr.f32.gmra.mrb[0].mxu0 %v798
      %v876 = vpop.f32.mrb[0].mxu0
      %v877 = vadd.f32 0.0, %v876
      %v878 = vpop.f32.mrb[0].mxu0
      %879 = vdwg.mxu0
      %880 = vmatprep.subr.mxu0 0.0
      %881 = vmatpush1.msra.mxu0 %v715
      %882 = vmatprep.subr.mxu0 0.0
      %883 = vmatpush1.msra.mxu0 %v716
      %884 = vmatprep.subr.mxu0 0.0
      %885 = vmatpush1.msra.mxu0 %v717
      %886 = vmatprep.subr.mxu0 0.0
      %887 = vmatpush1.msra.mxu0 %v718
      %888 = vmatprep.subr.mxu0 0.0
      %889 = vmatpush1.msra.mxu0 %v719
      %890 = vmatprep.subr.mxu0 0.0
      %891 = vmatpush1.msra.mxu0 %v720
      %892 = vmatprep.subr.mxu0 0.0
      %893 = vmatpush1.msra.mxu0 %v721
      %894 = vmatprep.subr.mxu0 0.0
      %895 = vmatpush1.msra.mxu0 %v722
      %896 = vmatprep.subr.mxu0 0.0
      %897 = vmatpush1.msra.mxu0 %v723
      %898 = vmatprep.subr.mxu0 0.0
      %899 = vmatpush1.msra.mxu0 %v724
      %900 = vmatprep.subr.mxu0 0.0
      %901 = vmatpush1.msra.mxu0 %v725
      %902 = vmatprep.subr.mxu0 0.0
      %903 = vmatpush1.msra.mxu0 %v726
      %904 = vmatprep.subr.mxu0 0.0
      %905 = vmatpush1.msra.mxu0 %v727
      %906 = vmatprep.subr.mxu0 0.0
      %907 = vmatpush1.msra.mxu0 %v728
      %908 = vmatprep.subr.mxu0 0.0
      %909 = vmatpush1.msra.mxu0 %v729
      %910 = vmatprep.subr.mxu0 0.0
      %911 = vmatpush1.msra.mxu0 %v730
      %912 = vmatprep.subr.mxu0 0.0
      %913 = vmatpush1.msra.mxu0 %v731
      %914 = vmatprep.subr.mxu0 0.0
      %915 = vmatpush1.msra.mxu0 %v732
      %916 = vmatprep.subr.mxu0 0.0
      %917 = vmatpush1.msra.mxu0 %v733
      %918 = vmatprep.subr.mxu0 0.0
      %919 = vmatpush1.msra.mxu0 %v734
      %920 = vmatprep.subr.mxu0 0.0
      %921 = vmatpush1.msra.mxu0 %v735
      %922 = vmatprep.subr.mxu0 0.0
      %923 = vmatpush1.msra.mxu0 %v736
      %924 = vmatprep.subr.mxu0 0.0
      %925 = vmatpush1.msra.mxu0 %v737
      %926 = vmatprep.subr.mxu0 0.0
      %927 = vmatpush1.msra.mxu0 %v738
      %928 = vmatprep.subr.mxu0 0.0
      %929 = vmatpush1.msra.mxu0 %v739
      %930 = vmatprep.subr.mxu0 0.0
      %931 = vmatpush1.msra.mxu0 %v740
      %932 = vmatprep.subr.mxu0 0.0
      %933 = vmatpush1.msra.mxu0 %v741
      %934 = vmatprep.subr.mxu0 0.0
      %935 = vmatpush1.msra.mxu0 %v742
      %936 = vmatprep.subr.mxu0 0.0
      %937 = vmatpush1.msra.mxu0 %v743
      %938 = vmatprep.subr.mxu0 0.0
      %939 = vmatpush1.msra.mxu0 %v744
      %940 = vmatprep.subr.mxu0 0.0
      %941 = vmatpush1.msra.mxu0 %v745
      %942 = vmatprep.subr.mxu0 0.0
      %943 = vmatpush1.msra.mxu0 %v746
      %944 = vmatprep.mubr.f32.mxu0 %v712
      %945 = vmatmul.mubr.f32.gmra.mrb[0].mxu0 %v711
      %v946 = vpop.f32.mrb[0].mxu0
      %v947 = vadd.f32 %v872, %v946
      %v948 = vpop.f32.mrb[0].mxu0
      %949 = vmatprep.mubr.f32.mxu0 %v714
      %950 = vmatmul.mubr.f32.gmra.mrb[0].mxu0 %v713
      %v951 = vpop.f32.mrb[0].mxu0
      %v952 = vadd.f32 %v877, %v951
      %v953 = vpop.f32.mrb[0].mxu0
      %954 = vdwg.mxu0
      %v955 = vld [vmem:[#allocation3] sm:$0xfc]
      %v956 = vld [vmem:[#allocation3 + $0x8] sm:$0xfc]
      %v957 = vld [vmem:[#allocation3 + $0x20] sm:$0x3]
      %v958 = vld [vmem:[#allocation3 + $0x28] sm:$0x3]
      %s959 = scalar_lea.vmem %s6, 512
      %v960 = vld [vmem:[%s959] sm:$0xff]
      %v961 = vld [vmem:[%s959 + $0x8] sm:$0xff]
      %v962 = vld [vmem:[%s959 + $0x10] sm:$0xff]
      %v963 = vld [vmem:[%s959 + $0x18] sm:$0xff]
      %v964 = vld [vmem:[%s959 + $0x20] sm:$0xff]
      %v965 = vld [vmem:[%s959 + $0x28] sm:$0xff]
      %v966 = vld [vmem:[%s959 + $0x30] sm:$0xff]
      %v967 = vld [vmem:[%s959 + $0x38] sm:$0xff]
      %v968 = vld [vmem:[%s959 + $0x40] sm:$0xff]
      %v969 = vld [vmem:[%s959 + $0x48] sm:$0xff]
      %v970 = vld [vmem:[%s959 + $0x50] sm:$0xff]
      %v971 = vld [vmem:[%s959 + $0x58] sm:$0xff]
      %v972 = vld [vmem:[%s959 + $0x60] sm:$0xff]
      %v973 = vld [vmem:[%s959 + $0x68] sm:$0xff]
      %v974 = vld [vmem:[%s959 + $0x70] sm:$0xff]
      %v975 = vld [vmem:[%s959 + $0x78] sm:$0xff]
      %v976 = vld [vmem:[%s959 + $0x80] sm:$0xff]
      %v977 = vld [vmem:[%s959 + $0x88] sm:$0xff]
      %v978 = vld [vmem:[%s959 + $0x90] sm:$0xff]
      %v979 = vld [vmem:[%s959 + $0x98] sm:$0xff]
      %v980 = vld [vmem:[%s959 + $0xa0] sm:$0xff]
      %v981 = vld [vmem:[%s959 + $0xa8] sm:$0xff]
      %v982 = vld [vmem:[%s959 + $0xb0] sm:$0xff]
      %v983 = vld [vmem:[%s959 + $0xb8] sm:$0xff]
      %v984 = vld [vmem:[%s959 + $0xc0] sm:$0xff]
      %v985 = vld [vmem:[%s959 + $0xc8] sm:$0xff]
      %v986 = vld [vmem:[%s959 + $0xd0] sm:$0xff]
      %v987 = vld [vmem:[%s959 + $0xd8] sm:$0xff]
      %v988 = vld [vmem:[%s959 + $0xe0] sm:$0xff]
      %v989 = vld [vmem:[%s959 + $0xe8] sm:$0xff]
      %v990 = vld [vmem:[%s959 + $0xf0] sm:$0xff]
      %v991 = vld [vmem:[%s959 + $0xf8] sm:$0xff]
      %vm996 = vcmask 1045504
      %v997 = vrot.slane %v955, 2
      %v998 = vrot.slane %v713, 2
      %v999 = vsel %vm996, %v997, %v998
      %v1000 = vrot.slane %v956, 2
      %v1001 = vrot.slane %v714, 2
      %v1002 = vsel %vm996, %v1000, %v1001
      %v1003 = vrot.slane %v957, 2
      %v1004 = vsel %vm996, %v998, %v1003
      %v1005 = vrot.slane %v958, 2
      %v1006 = vsel %vm996, %v1001, %v1005
      %1011 = vmatprep.subr.mxu0 0.0
      %1012 = vmatpush1.msra.mxu0 %v960
      %1013 = vmatprep.subr.mxu0 0.0
      %1014 = vmatpush1.msra.mxu0 %v961
      %1015 = vmatprep.subr.mxu0 0.0
      %1016 = vmatpush1.msra.mxu0 %v962
      %1017 = vmatprep.subr.mxu0 0.0
      %1018 = vmatpush1.msra.mxu0 %v963
      %1019 = vmatprep.subr.mxu0 0.0
      %1020 = vmatpush1.msra.mxu0 %v964
      %1021 = vmatprep.subr.mxu0 0.0
      %1022 = vmatpush1.msra.mxu0 %v965
      %1023 = vmatprep.subr.mxu0 0.0
      %1024 = vmatpush1.msra.mxu0 %v966
      %1025 = vmatprep.subr.mxu0 0.0
      %1026 = vmatpush1.msra.mxu0 %v967
      %1027 = vmatprep.subr.mxu0 0.0
      %1028 = vmatpush1.msra.mxu0 %v968
      %1029 = vmatprep.subr.mxu0 0.0
      %1030 = vmatpush1.msra.mxu0 %v969
      %1031 = vmatprep.subr.mxu0 0.0
      %1032 = vmatpush1.msra.mxu0 %v970
      %1033 = vmatprep.subr.mxu0 0.0
      %1034 = vmatpush1.msra.mxu0 %v971
      %1035 = vmatprep.subr.mxu0 0.0
      %1036 = vmatpush1.msra.mxu0 %v972
      %1037 = vmatprep.subr.mxu0 0.0
      %1038 = vmatpush1.msra.mxu0 %v973
      %1039 = vmatprep.subr.mxu0 0.0
      %1040 = vmatpush1.msra.mxu0 %v974
      %1041 = vmatprep.subr.mxu0 0.0
      %1042 = vmatpush1.msra.mxu0 %v975
      %1043 = vmatprep.subr.mxu0 0.0
      %1044 = vmatpush1.msra.mxu0 %v976
      %1045 = vmatprep.subr.mxu0 0.0
      %1046 = vmatpush1.msra.mxu0 %v977
      %1047 = vmatprep.subr.mxu0 0.0
      %1048 = vmatpush1.msra.mxu0 %v978
      %1049 = vmatprep.subr.mxu0 0.0
      %1050 = vmatpush1.msra.mxu0 %v979
      %1051 = vmatprep.subr.mxu0 0.0
      %1052 = vmatpush1.msra.mxu0 %v980
      %1053 = vmatprep.subr.mxu0 0.0
      %1054 = vmatpush1.msra.mxu0 %v981
      %1055 = vmatprep.subr.mxu0 0.0
      %1056 = vmatpush1.msra.mxu0 %v982
      %1057 = vmatprep.subr.mxu0 0.0
      %1058 = vmatpush1.msra.mxu0 %v983
      %1059 = vmatprep.subr.mxu0 0.0
      %1060 = vmatpush1.msra.mxu0 %v984
      %1061 = vmatprep.subr.mxu0 0.0
      %1062 = vmatpush1.msra.mxu0 %v985
      %1063 = vmatprep.subr.mxu0 0.0
      %1064 = vmatpush1.msra.mxu0 %v986
      %1065 = vmatprep.subr.mxu0 0.0
      %1066 = vmatpush1.msra.mxu0 %v987
      %1067 = vmatprep.subr.mxu0 0.0
      %1068 = vmatpush1.msra.mxu0 %v988
      %1069 = vmatprep.subr.mxu0 0.0
      %1070 = vmatpush1.msra.mxu0 %v989
      %1071 = vmatprep.subr.mxu0 0.0
      %1072 = vmatpush1.msra.mxu0 %v990
      %1073 = vmatprep.subr.mxu0 0.0
      %1074 = vmatpush1.msra.mxu0 %v991
      %1075 = vmatprep.mubr.f32.mxu0 %v1002
      %1076 = vmatmul.mubr.f32.gmra.mrb[0].mxu0 %v999
      %v1077 = vpop.f32.mrb[0].mxu0
      %v1078 = vadd.f32 0.0, %v1077
      %v1079 = vpop.f32.mrb[0].mxu0
      %1080 = vmatprep.mubr.f32.mxu0 %v1006
      %1081 = vmatmul.mubr.f32.gmra.mrb[0].mxu0 %v1004
      %v1082 = vpop.f32.mrb[0].mxu0
      %v1083 = vadd.f32 0.0, %v1082
      %v1084 = vpop.f32.mrb[0].mxu0
      %1085 = vdwg.mxu0
      %v1086 = vadd.f32 %v947, %v1078
      %v1087 = vadd.f32 %v952, %v1083
      %v1088 = vld [vmem:[#allocation2 + $0x1] sm:$0xff]
      %v1089 = vld [vmem:[#allocation2 + $0x9] sm:$0xff]
      %v1090 = vld [vmem:[%s7] sm:$0xff]
      %v1091 = vld [vmem:[%s7 + $0x8] sm:$0xff]
      %v1092 = vld [vmem:[%s7 + $0x10] sm:$0xff]
      %v1093 = vld [vmem:[%s7 + $0x18] sm:$0xff]
      %v1094 = vld [vmem:[%s7 + $0x20] sm:$0xff]
      %v1095 = vld [vmem:[%s7 + $0x28] sm:$0xff]
      %v1096 = vld [vmem:[%s7 + $0x30] sm:$0xff]
      %v1097 = vld [vmem:[%s7 + $0x38] sm:$0xff]
      %v1099 = vsel %vm340, %v1088, 0
      %v1102 = vsel %vm340, %v1089, 0
      %1104 = vmatprep.subr.mxu0 0.0
      %1105 = vmatpush1.msra.mxu0 %v1090
      %1106 = vmatprep.subr.mxu0 0.0
      %1107 = vmatpush1.msra.mxu0 %v1091
      %1108 = vmatprep.subr.mxu0 0.0
      %1109 = vmatpush1.msra.mxu0 %v1092
      %1110 = vmatprep.subr.mxu0 0.0
      %1111 = vmatpush1.msra.mxu0 %v1093
      %1112 = vmatprep.subr.mxu0 0.0
      %1113 = vmatpush1.msra.mxu0 %v1094
      %1114 = vmatprep.subr.mxu0 0.0
      %1115 = vmatpush1.msra.mxu0 %v1095
      %1116 = vmatprep.subr.mxu0 0.0
      %1117 = vmatpush1.msra.mxu0 %v1096
      %1118 = vmatprep.subr.mxu0 0.0
      %1119 = vmatpush1.msra.mxu0 %v1097
      %1120 = vmatprep.subr.mxu0 0.0
      %1121 = vmatpush1.msra.mxu0 0.0
      %1122 = vmatprep.subr.mxu0 0.0
      %1123 = vmatpush1.msra.mxu0 0.0
      %1124 = vmatprep.subr.mxu0 0.0
      %1125 = vmatpush1.msra.mxu0 0.0
      %1126 = vmatprep.subr.mxu0 0.0
      %1127 = vmatpush1.msra.mxu0 0.0
      %1128 = vmatprep.subr.mxu0 0.0
      %1129 = vmatpush1.msra.mxu0 0.0
      %1130 = vmatprep.subr.mxu0 0.0
      %1131 = vmatpush1.msra.mxu0 0.0
      %1132 = vmatprep.subr.mxu0 0.0
      %1133 = vmatpush1.msra.mxu0 0.0
      %1134 = vmatprep.subr.mxu0 0.0
      %1135 = vmatpush1.msra.mxu0 0.0
      %1136 = vmatprep.subr.mxu0 0.0
      %1137 = vmatpush1.msra.mxu0 0.0
      %1138 = vmatprep.subr.mxu0 0.0
      %1139 = vmatpush1.msra.mxu0 0.0
      %1140 = vmatprep.subr.mxu0 0.0
      %1141 = vmatpush1.msra.mxu0 0.0
      %1142 = vmatprep.subr.mxu0 0.0
      %1143 = vmatpush1.msra.mxu0 0.0
      %1144 = vmatprep.subr.mxu0 0.0
      %1145 = vmatpush1.msra.mxu0 0.0
      %1146 = vmatprep.subr.mxu0 0.0
      %1147 = vmatpush1.msra.mxu0 0.0
      %1148 = vmatprep.subr.mxu0 0.0
      %1149 = vmatpush1.msra.mxu0 0.0
      %1150 = vmatprep.subr.mxu0 0.0
      %1151 = vmatpush1.msra.mxu0 0.0
      %1152 = vmatprep.subr.mxu0 0.0
      %1153 = vmatpush1.msra.mxu0 0.0
      %1154 = vmatprep.subr.mxu0 0.0
      %1155 = vmatpush1.msra.mxu0 0.0
      %1156 = vmatprep.subr.mxu0 0.0
      %1157 = vmatpush1.msra.mxu0 0.0
      %1158 = vmatprep.subr.mxu0 0.0
      %1159 = vmatpush1.msra.mxu0 0.0
      %1160 = vmatprep.subr.mxu0 0.0
      %1161 = vmatpush1.msra.mxu0 0.0
      %1162 = vmatprep.subr.mxu0 0.0
      %1163 = vmatpush1.msra.mxu0 0.0
      %1164 = vmatprep.subr.mxu0 0.0
      %1165 = vmatpush1.msra.mxu0 0.0
      %1166 = vmatprep.subr.mxu0 0.0
      %1167 = vmatpush1.msra.mxu0 0.0
      %1168 = vmatprep.mubr.f32.mxu0 0.0
      %1169 = vmatmul.mubr.f32.gmra.mrb[0].mxu0 %v1099
      %v1170 = vpop.f32.mrb[0].mxu0
      %v1171 = vadd.f32 0.0, %v1170
      %v1172 = vpop.f32.mrb[0].mxu0
      %1173 = vmatprep.mubr.f32.mxu0 0.0
      %1174 = vmatmul.mubr.f32.gmra.mrb[0].mxu0 %v1102
      %v1175 = vpop.f32.mrb[0].mxu0
      %v1176 = vadd.f32 0.0, %v1175
      %v1177 = vpop.f32.mrb[0].mxu0
      %1178 = vdwg.mxu0
      %v1179 = vadd.f32 %v1086, %v1171
      %v1180 = vadd.f32 %v1087, %v1176
      %1181 = vst [vmem:[%s305] sm:$0xff] %v1179
      %1182 = vst [vmem:[%s305 + $0x8] sm:$0xff] %v1180
      %p1183 = scmp.lt.s32.totalorder %s19, 1
      %s1184 = scalar_select %p1183, %s19, 1
      %s1185 = smul.addr %s1184, 2
      %s1186 = smul.addr %s1185, 8
      %s1187 = scalar_lea.vmem %s8, %s1186
      // Predicated region
      $region53: #{wide_basic_forward.1} parent=51 // pred_check
        %p1188 = pneg %p210
      $region54: #{wide_basic_forward.1} parent=51 // pred_check_branch
        %1190 = sbr.rel (%p1188) target = $region56
      $region55: #{wide_basic_forward.1} parent=51 // pred_region
        _
      $region56: #{wide_basic_forward.1} parent=51 // pred_fallthru
        _
    $region52: #{wide_basic_forward.1} parent=5 // pred_fallthru
      _
    %p1191 = scmp.le.s32.totalorder 2, %s14
    // Predicated region
    $region57: #{wide_basic_forward.1} parent=5 // pred_check
      %p1192 = pneg %p1191
    $region58: #{wide_basic_forward.1} parent=5 // pred_check_branch
      %1194 = sbr.rel (%p1192) target = $region60
    $region59: #{wide_basic_forward.1} parent=5 // pred_region
      %s1195 = ssub.s32 %s14, 2
      // Predicated region
      $region61: #{wide_basic_forward.1} parent=59 // pred_check
        %p1196 = pneg %p216
      $region62: #{wide_basic_forward.1} parent=59 // pred_check_branch
        %1198 = sbr.rel (%p1196) target = $region64
      $region63: #{wide_basic_forward.1} parent=59 // pred_region
        %p1199 = scmp.lt.s32.totalorder %s20, 1
        %s1200 = scalar_select %p1199, %s20, 1
        %s1201 = smul.addr %s1200, 2
        %s1202 = smul.addr %s1201, 8
        %s1203 = scalar_lea.vmem %s8, %s1202
      $region64: #{wide_basic_forward.1} parent=59 // pred_fallthru
        _
    $region60: #{wide_basic_forward.1} parent=5 // pred_fallthru
      _
  $region6: #{wide_basic_forward.1} parent=0 // loop_footer
    %s18 = sadd.s32 1, %s14
  $region7: #{wide_basic_forward.1} parent=0 // loop_footer_branch
    %13 = sbr.rel target = $region3
  $region8: #{wide_basic_forward.1} parent=0 // loop_exit
    _

</llo_original>
